<compile_context>
chip_gen: v7x
topology: tpu7x:2x2x1
jax: 0.10.0
libtpu: 0.0.40
codegen_flags: <defaults>
</compile_context>

<pallas_src>
import functools

import jax
import jax.numpy as jnp
from jax.experimental import pallas as pl
from jax.experimental.pallas import tpu as pltpu

PAD_ID = 0  # deterministic stand-in for the module-level PAD_ID constant

_MIB = 1024 * 1024


# ----------------------------------------------------------------------------
# VMEM / tiling helpers
# ----------------------------------------------------------------------------
def _vmem_capacity_bytes():
    """Physical VMEM per TensorCore; conservative fallback if the query fails."""
    try:
        fn = getattr(pltpu, "get_tpu_info", None)
        if fn is not None:
            cap = getattr(fn(), "vmem_capacity_bytes", None)
            if cap:
                return int(cap)
    except Exception:
        pass
    return 64 * _MIB  # v7x per-TC VMEM (smallest of the targeted generations)


def _vmem_limit_bytes():
    cap = _vmem_capacity_bytes()
    # ~40 MiB on v7x (64 MiB physical), ~96 MiB on v5e/v6e (128 MiB physical).
    return max(32 * _MIB, min(cap - 24 * _MIB, 96 * _MIB))


def _round_up8(x):
    return ((x + 7) // 8) * 8


def _pick_row_tile(n_rows, v, in_itemsize, elementwise_out, vmem_limit):
    """Largest multiple-of-8 row tile fitting a conservative VMEM budget."""
    # Per row of the tile:
    #   double-buffered input tile + ~5 live f32 (TN,V)-sized in-kernel temps
    #   (+ double-buffered f32 loss output tile when reduction == 'none').
    per_row = v * (2 * in_itemsize + 5 * 4) + 16
    if elementwise_out:
        per_row += 2 * v * 4
    budget = (vmem_limit * 3) // 5
    tn = int(budget // max(per_row, 1))
    tn = max(8, min(1024, (tn // 8) * 8))
    tn = min(tn, _round_up8(n_rows))
    # Keep >= 2 grid steps so the "parallel" axis can be sharded across both
    # TensorCores on v7x (a single extra ~0.35us step elsewhere; harmless).
    if n_rows > 8:
        tn = min(tn, _round_up8(-(-n_rows // 2)))
    return tn


# ----------------------------------------------------------------------------
# Kernels
# ----------------------------------------------------------------------------
def _ce_tile_stats_kernel(logp_ref, tgt_ref, stats_ref, *,
                          smoothing, ignore_index, n_rows):
    """mean/sum path: per-tile [loss_sum, valid_count], lane-dense (8,128) block.

    stats block layout: [0, 0] = tile loss sum, [0, 1] = tile valid count,
    everything else zero, so the wrapper just sums two columns.
    """
    i = pl.program_id(0)
    logp = logp_ref[...].astype(jnp.float32)            # (TN, V); cast in-kernel
    tgt = tgt_ref[...]                                   # (TN, 1) int32
    tn, v = logp.shape

    finite = jnp.isfinite(logp)                          # (TN, V) bool
    finite_f32 = finite.astype(jnp.float32)              # (TN, V)
    mlogp = jnp.where(finite, logp, 0.0)                 # (TN, V)
    col = jax.lax.broadcasted_iota(jnp.int32, (1, v), 1)  # (1, V) lane iota
    tgt_logp = jnp.where(col == tgt, mlogp, 0.0)         # (TN, V)

    # Lane reductions on the otherwise-idle MXU (f32 accumulation).
    ones_v = jnp.ones((v, 1), jnp.float32)
    dot = functools.partial(jnp.dot, precision=jax.lax.Precision.HIGHEST,
                            preferred_element_type=jnp.float32)
    n_cls = dot(finite_f32, ones_v)                      # (TN, 1) #finite classes
    s_row = dot(mlogp, ones_v)                           # (TN, 1) sum of finite logp
    t_row = dot(tgt_logp, ones_v)                        # (TN, 1) logp at target col

    # Per-row smoothed-CE sum:
    #   (1 - smoothing) * logp[tgt] + (smoothing / n_cls) * (sum_finite - logp[tgt])
    smooth_prob = smoothing / jnp.maximum(n_cls, 1.0)    # (TN, 1)
    row_nll = (1.0 - smoothing) * t_row + smooth_prob * (s_row - t_row)

    # Mask ignored rows and out-of-bounds rows of the ragged last tile at the
    # already-reduced (TN,1) stage (also neutralizes any garbage OOB values).
    row_ids = jax.lax.broadcasted_iota(jnp.int32, (tn, 1), 0)
    counted = jnp.logical_and(i * tn + row_ids < n_rows, tgt != ignore_index)
    row_nll = jnp.where(counted, row_nll, 0.0)

    tile_loss = -jnp.sum(row_nll)                        # scalar
    tile_cnt = jnp.sum(counted.astype(jnp.float32))      # scalar

    r8 = jax.lax.broadcasted_iota(jnp.int32, (8, 128), 0)
    c128 = jax.lax.broadcasted_iota(jnp.int32, (8, 128), 1)
    first = r8 == 0
    stats_ref[...] = jnp.where(first & (c128 == 0), tile_loss,
                               jnp.where(first & (c128 == 1), tile_cnt, 0.0))


def _ce_elementwise_kernel(logp_ref, tgt_ref, loss_ref, *,
                           smoothing, ignore_index, n_rows):
    """'none' path: emit the full elementwise loss tile (f32, as in the reference)."""
    i = pl.program_id(0)
    logp = logp_ref[...].astype(jnp.float32)             # (TN, V)
    tgt = tgt_ref[...]                                    # (TN, 1) int32
    tn, v = logp.shape

    finite = jnp.isfinite(logp)
    finite_f32 = finite.astype(jnp.float32)
    mlogp = jnp.where(finite, logp, 0.0)

    # Count finite classes per row on the MXU (exact: 0/1 inputs, f32 accumulate).
    ones_v = jnp.ones((v, 1), jnp.float32)
    n_cls = jnp.dot(finite_f32, ones_v,
                    precision=jax.lax.Precision.HIGHEST,
                    preferred_element_type=jnp.float32)   # (TN, 1)
    smooth_prob = smoothing / jnp.maximum(n_cls, 1.0)     # (TN, 1)

    col = jax.lax.broadcasted_iota(jnp.int32, (1, v), 1)
    smoothed = jnp.where(col == tgt, 1.0 - smoothing, smooth_prob * finite_f32)

    row_ids = jax.lax.broadcasted_iota(jnp.int32, (tn, 1), 0)
    counted = jnp.logical_and(i * tn + row_ids < n_rows, tgt != ignore_index)

    loss_ref[...] = jnp.where(counted, -smoothed * mlogp, 0.0)


# ----------------------------------------------------------------------------
# Wrapper
# ----------------------------------------------------------------------------
def smoothed_cross_entropy_loss(logp, target, smoothing, focal: float = 0.0,
                                ignore_index: int = PAD_ID,
                                reduction: str = 'mean'):
    # `focal` is accepted but (as in the reference forward pass) never used.
    assert reduction in {'mean', 'sum', 'none'}
    assert 0.0 < smoothing < 1.0
    assert target.shape == logp.shape[:target.ndim] and target.ndim + 1 == logp.ndim

    V = logp.shape[-1]
    logp2 = logp.reshape(-1, V)                    # native dtype; cast happens in-kernel
    tgt2 = target.reshape(-1, 1).astype(jnp.int32)
    N = logp2.shape[0]

    vmem_limit = _vmem_limit_bytes()
    TN = _pick_row_tile(N, V, logp2.dtype.itemsize, reduction == 'none', vmem_limit)
    num_tiles = -(-N // TN)

    in_specs = [pl.BlockSpec((TN, V), lambda i: (i, 0)),
                pl.BlockSpec((TN, 1), lambda i: (i, 0))]
    cparams = pltpu.CompilerParams(
        dimension_semantics=("parallel",),
        vmem_limit_bytes=int(vmem_limit))

    if reduction == 'none':
        # TODO(synk): for V not a multiple of 128 the elementwise output still uses
        # masked partial stores; lane-padding V (and/or emitting bf16) would speed
        # this path up but changes output layout/dtype vs. the f32 reference.
        kernel = functools.partial(_ce_elementwise_kernel,
                                   smoothing=float(smoothing),
                                   ignore_index=int(ignore_index), n_rows=N)
        return pl.pallas_call(
            kernel,
            out_shape=jax.ShapeDtypeStruct((N, V), jnp.float32),
            grid=(num_tiles,),
            in_specs=in_specs,
            out_specs=pl.BlockSpec((TN, V), lambda i: (i, 0)),
            compiler_params=cparams,
        )(logp2, tgt2)

    kernel = functools.partial(_ce_tile_stats_kernel,
                               smoothing=float(smoothing),
                               ignore_index=int(ignore_index), n_rows=N)
    stats = pl.pallas_call(
        kernel,
        out_shape=jax.ShapeDtypeStruct((num_tiles * 8, 128), jnp.float32),
        grid=(num_tiles,),
        in_specs=in_specs,
        out_specs=pl.BlockSpec((8, 128), lambda i: (i, 0)),
        compiler_params=cparams,
    )(logp2, tgt2)

    total = jnp.sum(stats[:, 0])
    if reduction == 'sum':
        return total
    cnt = jnp.sum(stats[:, 1])
    return jnp.where(cnt > 0, total / cnt, jnp.float32(0.0))


# ----------------------------------------------------------------------------
# Pure-JAX reference mirroring the PyTorch forward pass
# ----------------------------------------------------------------------------
def _reference(logp, target, smoothing, ignore_index, reduction):
    V = logp.shape[-1]
    lp = logp.reshape(-1, V).astype(jnp.float32)
    tg = target.reshape(-1).astype(jnp.int32)
    finite = jnp.isfinite(lp)
    n_cls = jnp.sum(finite, axis=-1, keepdims=True).astype(jnp.float32)
    sm = jnp.where(finite, smoothing / jnp.maximum(n_cls, 1.0), 0.0)
    col = jnp.arange(V, dtype=jnp.int32)[None, :]
    sm = jnp.where(col == tg[:, None], 1.0 - smoothing, sm)
    sm = jnp.where((tg == ignore_index)[:, None], 0.0, sm)
    loss = -sm * jnp.where(finite, lp, 0.0)
    if reduction == 'none':
        return loss
    if reduction == 'sum':
        return loss.sum()
    cnt = jnp.sum(tg != ignore_index).astype(jnp.float32)
    return jnp.where(cnt > 0, loss.sum() / cnt, 0.0)


if __name__ == "__main__":
    key = jax.random.PRNGKey(0)
    smoothing = 0.1

    def make_inputs(k, B, S, V, pad_tail):
        k1, k2, k3 = jax.random.split(k, 3)
        logits = jax.random.normal(k1, (B, S, V), jnp.float32)
        # make a few classes impossible (-inf) to exercise the finite mask
        kill = jax.random.bernoulli(k2, 0.1, (B, S, V))
        logits = jnp.where(kill, -jnp.inf, logits)
        logp = jax.nn.log_softmax(logits, axis=-1)
        target = jax.random.randint(k3, (B, S), 0, V, jnp.int32)
        if pad_tail:
            target = target.at[:, -2:].set(PAD_ID)  # force ignored positions
        return logp, target

    cases = [
        make_inputs(jax.random.fold_in(key, 0), 2, 8, 32, True),   # even tiles
        make_inputs(jax.random.fold_in(key, 1), 3, 5, 32, True),   # ragged rows
    ]

    for logp, target in cases:
        out_mean = smoothed_cross_entropy_loss(logp, target, smoothing, reduction='mean')
        out_sum = smoothed_cross_entropy_loss(logp, target, smoothing, reduction='sum')
        out_none = smoothed_cross_entropy_loss(logp, target, smoothing, reduction='none')
        jax.block_until_ready((out_mean, out_sum, out_none))

        ref_mean = _reference(logp, target, smoothing, PAD_ID, 'mean')
        ref_sum = _reference(logp, target, smoothing, PAD_ID, 'sum')
        ref_none = _reference(logp, target, smoothing, PAD_ID, 'none')

        assert jnp.allclose(out_mean, ref_mean, rtol=1e-5, atol=1e-5)
        assert jnp.allclose(out_sum, ref_sum, rtol=1e-5, atol=1e-5)
        assert out_none.shape == ref_none.shape
        assert jnp.allclose(out_none, ref_none, rtol=1e-5, atol=1e-5)

    # All-ignored edge case: mean must be 0.0
    logp_all, _ = cases[0]
    tgt_all_pad = jnp.zeros((2, 8), jnp.int32)
    out_zero = smoothed_cross_entropy_loss(logp_all, tgt_all_pad, smoothing, reduction='mean')
    jax.block_until_ready(out_zero)
    assert jnp.allclose(out_zero, _reference(logp_all, tgt_all_pad, smoothing, PAD_ID, 'mean'),
                        rtol=1e-5, atol=1e-5)

    print("KERNEL_OK")
</pallas_src>

<mosaic_0001>
module attributes {stable_mosaic.version = 11 : i64} {
  func.func @_ce_tile_stats_kernel(%arg0: i32, %arg1: memref<8x32xf32, #tpu.memory_space<vmem>>, %arg2: memref<8x1xi32, #tpu.memory_space<vmem>>, %arg3: memref<8x128xf32, #tpu.memory_space<vmem>>) attributes {dimension_semantics = [#tpu.dimension_semantics<parallel>], iteration_bounds = array<i64: 2>, scalar_prefetch = 0 : i64, scratch_operands = 0 : i64, tpu.core_type = #tpu.core_type<tc>, window_params = [{transform_indices = @transform_0, window_bounds = array<i64: 8, 32>}, {transform_indices = @transform_1, window_bounds = array<i64: 8, 1>}, {transform_indices = @transform_2, window_bounds = array<i64: 8, 128>}]} {
    %c0 = arith.constant 0 : index
    %c0_0 = arith.constant 0 : index
    %0 = vector.load %arg1[%c0, %c0_0] : memref<8x32xf32, #tpu.memory_space<vmem>>, vector<8x32xf32>
    %c0_1 = arith.constant 0 : index
    %c0_2 = arith.constant 0 : index
    %1 = vector.load %arg2[%c0_1, %c0_2] : memref<8x1xi32, #tpu.memory_space<vmem>>, vector<8x1xi32>
    %2 = tpu.weird %0 : vector<8x32xf32> -> vector<8x32xi1>
    %cst = arith.constant dense<true> : vector<8x32xi1>
    %3 = arith.xori %2, %cst : vector<8x32xi1>
    %4 = arith.extui %3 : vector<8x32xi1> to vector<8x32xi32>
    %5 = arith.sitofp %4 : vector<8x32xi32> to vector<8x32xf32>
    %cst_3 = arith.constant 0.000000e+00 : f32
    %6 = vector.broadcast %cst_3 : f32 to vector<8x32xf32>
    %7 = arith.select %3, %0, %6 : vector<8x32xi1>, vector<8x32xf32>
    %8 = tpu.iota {dimensions = array<i32: 1>} : vector<1x32xi32>
    %9 = vector.broadcast %8 : vector<1x32xi32> to vector<8x32xi32>
    %10 = vector.broadcast %1 : vector<8x1xi32> to vector<8x32xi32>
    %11 = arith.cmpi eq, %9, %10 : vector<8x32xi32>
    %cst_4 = arith.constant 0.000000e+00 : f32
    %12 = vector.broadcast %cst_4 : f32 to vector<8x32xf32>
    %13 = arith.select %11, %7, %12 : vector<8x32xi1>, vector<8x32xf32>
    %cst_5 = arith.constant 1.000000e+00 : f32
    %14 = vector.broadcast %cst_5 : f32 to vector<32x1xf32>
    %cst_6 = arith.constant dense<0.000000e+00> : vector<8x1xf32>
    %15 = tpu.matmul %5, %14, %cst_6 {dimension_numbers = #tpu.dot_dimension_numbers<[1], [0], [0], [1], [0, 0, 1, 1], [], []>, precision = #tpu.contract_precision<fp32>} : vector<8x32xf32>, vector<32x1xf32>, vector<8x1xf32> -> vector<8x1xf32>
    %cst_7 = arith.constant dense<0.000000e+00> : vector<8x1xf32>
    %16 = tpu.matmul %7, %14, %cst_7 {dimension_numbers = #tpu.dot_dimension_numbers<[1], [0], [0], [1], [0, 0, 1, 1], [], []>, precision = #tpu.contract_precision<fp32>} : vector<8x32xf32>, vector<32x1xf32>, vector<8x1xf32> -> vector<8x1xf32>
    %cst_8 = arith.constant dense<0.000000e+00> : vector<8x1xf32>
    %17 = tpu.matmul %13, %14, %cst_8 {dimension_numbers = #tpu.dot_dimension_numbers<[1], [0], [0], [1], [0, 0, 1, 1], [], []>, precision = #tpu.contract_precision<fp32>} : vector<8x32xf32>, vector<32x1xf32>, vector<8x1xf32> -> vector<8x1xf32>
    %cst_9 = arith.constant 1.000000e+00 : f32
    %18 = vector.broadcast %cst_9 : f32 to vector<8x1xf32>
    %19 = arith.maximumf %15, %18 : vector<8x1xf32>
    %cst_10 = arith.constant 1.000000e-01 : f32
    %20 = vector.broadcast %cst_10 : f32 to vector<8x1xf32>
    %21 = arith.divf %20, %19 : vector<8x1xf32>
    %cst_11 = arith.constant 0.899999976 : f32
    %22 = vector.broadcast %cst_11 : f32 to vector<8x1xf32>
    %23 = arith.mulf %22, %17 : vector<8x1xf32>
    %24 = arith.subf %16, %17 : vector<8x1xf32>
    %25 = arith.mulf %21, %24 : vector<8x1xf32>
    %26 = arith.addf %23, %25 : vector<8x1xf32>
    %27 = tpu.iota {dimensions = array<i32: 0>} : vector<8x1xi32>
    %c8_i32 = arith.constant 8 : i32
    %28 = arith.muli %arg0, %c8_i32 : i32
    %29 = vector.broadcast %28 : i32 to vector<8x1xi32>
    %30 = arith.addi %29, %27 : vector<8x1xi32>
    %c16_i32 = arith.constant 16 : i32
    %31 = vector.broadcast %c16_i32 : i32 to vector<8x1xi32>
    %32 = arith.cmpi slt, %30, %31 : vector<8x1xi32>
    %c0_i32 = arith.constant 0 : i32
    %33 = vector.broadcast %c0_i32 : i32 to vector<8x1xi32>
    %34 = arith.cmpi ne, %1, %33 : vector<8x1xi32>
    %35 = arith.andi %32, %34 : vector<8x1xi1>
    %cst_12 = arith.constant 0.000000e+00 : f32
    %36 = vector.broadcast %cst_12 : f32 to vector<8x1xf32>
    %37 = arith.select %35, %26, %36 : vector<8x1xi1>, vector<8x1xf32>
    %38 = vector.shape_cast %37 : vector<8x1xf32> to vector<1x8x1xf32>
    %cst_13 = arith.constant dense<0.000000e+00> : vector<1xf32>
    %39 = vector.multi_reduction <add>, %38, %cst_13 [1, 2] : vector<1x8x1xf32> to vector<1xf32>
    %40 = vector.shape_cast %39 : vector<1xf32> to vector<1x1x1xf32>
    %41 = vector.extract %40[0, 0, 0] : f32 from vector<1x1x1xf32>
    %cst_14 = arith.constant 0.000000e+00 : f32
    %42 = arith.subf %cst_14, %41 : f32
    %43 = arith.extui %35 : vector<8x1xi1> to vector<8x1xi32>
    %44 = arith.sitofp %43 : vector<8x1xi32> to vector<8x1xf32>
    %45 = vector.shape_cast %44 : vector<8x1xf32> to vector<1x8x1xf32>
    %cst_15 = arith.constant dense<0.000000e+00> : vector<1xf32>
    %46 = vector.multi_reduction <add>, %45, %cst_15 [1, 2] : vector<1x8x1xf32> to vector<1xf32>
    %47 = vector.shape_cast %46 : vector<1xf32> to vector<1x1x1xf32>
    %48 = vector.extract %47[0, 0, 0] : f32 from vector<1x1x1xf32>
    %49 = tpu.iota {dimensions = array<i32: 0>} : vector<8x128xi32>
    %50 = tpu.iota {dimensions = array<i32: 1>} : vector<8x128xi32>
    %c0_i32_16 = arith.constant 0 : i32
    %51 = vector.broadcast %c0_i32_16 : i32 to vector<8x128xi32>
    %52 = arith.cmpi eq, %49, %51 : vector<8x128xi32>
    %c0_i32_17 = arith.constant 0 : i32
    %53 = vector.broadcast %c0_i32_17 : i32 to vector<8x128xi32>
    %54 = arith.cmpi eq, %50, %53 : vector<8x128xi32>
    %55 = arith.andi %52, %54 : vector<8x128xi1>
    %c1_i32 = arith.constant 1 : i32
    %56 = vector.broadcast %c1_i32 : i32 to vector<8x128xi32>
    %57 = arith.cmpi eq, %50, %56 : vector<8x128xi32>
    %58 = arith.andi %52, %57 : vector<8x128xi1>
    %cst_18 = arith.constant 0.000000e+00 : f32
    %59 = vector.broadcast %48 : f32 to vector<8x128xf32>
    %60 = vector.broadcast %cst_18 : f32 to vector<8x128xf32>
    %61 = arith.select %58, %59, %60 : vector<8x128xi1>, vector<8x128xf32>
    %62 = vector.broadcast %42 : f32 to vector<8x128xf32>
    %63 = arith.select %55, %62, %61 : vector<8x128xi1>, vector<8x128xf32>
    %c0_19 = arith.constant 0 : index
    %c0_20 = arith.constant 0 : index
    %64 = vector.load %arg3[%c0_19, %c0_20] : memref<8x128xf32, #tpu.memory_space<vmem>>, vector<8x128xf32>
    tpu.vector_store %arg3[%c0_19, %c0_20], %63 {strides = array<i32>} : memref<8x128xf32, #tpu.memory_space<vmem>>, vector<8x128xf32>,
    return
  }
  func.func @transform_0(%arg0: i32) -> (i32, i32) {
    %c0_i32 = arith.constant 0 : i32
    %c0_i32_0 = arith.constant 0 : i32
    return %arg0, %c0_i32 : i32, i32
  }
  func.func @transform_1(%arg0: i32) -> (i32, i32) {
    %c0_i32 = arith.constant 0 : i32
    %c0_i32_0 = arith.constant 0 : i32
    return %arg0, %c0_i32 : i32, i32
  }
  func.func @transform_2(%arg0: i32) -> (i32, i32) {
    %c0_i32 = arith.constant 0 : i32
    %c0_i32_0 = arith.constant 0 : i32
    return %arg0, %c0_i32 : i32, i32
  }
}

</mosaic_0001>

<llo_original>
// kernel: tpu_custom_call.1
$region0: #{tpu_custom_call.1}
  #allocation0 [shape = 'u32[]', space=smem, size = 0x4, offset = 0x4, fixed_abs, tag = 'smem constant byte address 0x4 - core index']
  #allocation1 [shape = 'u32[144,128]{1,0:T(1,128)}', space=vmem, size = 0x12000, scoped, tag = 'internal scratch']
  %s0 = inlined_call_operand.vmem [shape: f32[16,32], index: 0, kind: input, shape index: {}]
  %s1 = inlined_call_operand.vmem [shape: s32[16,1], index: 1, kind: input, shape index: {}]
  %s2 = inlined_call_operand.hbm [shape: f32[16,128], index: 2, kind: output, shape index: {}]
  %s3 = sld [smem:[#allocation0]]
  $region41: #{tpu_custom_call.1} parent=0
    _
  %s5 = ssub.s32 1, %s3
  %s6 = scalar_select 0, %s5, %s3
  $region1: #{tpu_custom_call.1} parent=0
    #allocation2 [shape = 'u8[8192]{0}', space=vmem, size = 0x2000, scoped, tag = 'output window, operand 0']
    #allocation3 [shape = 's32[2]{0}', space=sflag, size = 0x8, scoped, tag = 'scoped memory for tpu_custom_call.1']
    %7 = vsyncpa [#allocation3], 0
    %s8 = scalar_lea.sflag [#allocation3], 1
    %9 = vsyncpa %s8, 0
    loop: start=0, step=1, limit=4
    $region2: #{tpu_custom_call.1} parent=1 // loop_pre_header
      _
    $region3: #{tpu_custom_call.1} parent=1 // loop_header
      %s11 = sphi 0, %s15
      %p12 = scmp.ge.s32.totalorder %s11, 4
      %s21 = sphi 0, %s23
      %s24 = sphi 0, %s21
      %s25 = sphi 0, %s24
      %s41 = sphi 0, %s25
      %s47 = sphi 0, %s49
      %s50 = sphi 0, %s47
      %s51 = sphi 0, %s50
      %s67 = sphi 0, %s51
      %s73 = sphi 0, %s75
      %s76 = sphi 0, %s73
      %s77 = sphi 0, %s76
      %s93 = sphi 0, %s77
    $region4: #{tpu_custom_call.1} parent=1 // loop_header_branch
      %14 = sbr.rel (%p12) target = $region8
    $region5: #{tpu_custom_call.1} parent=1 // loop_body
      %s16 = ssub.s32 %s11, 1
      %s17 = ssub.s32 %s11, 2
      %s18 = sadd.s32 %s11, 1
      %s19 = ssub.s32 %s11, %s18
      %p20 = scmp.eq.s32.totalorder %s19, 0
      %s22 = sadd.s32 %s21, 1
      %s23 = scalar_select %p20, %s21, %s22
      %p26 = pneg %p20
      %p27 = scmp.eq.s32.totalorder %s11, 1
      %p28 = por %p26, %p27
      %p29 = scmp.ne.s32.totalorder %s21, %s24
      %p30 = scmp.eq.s32.totalorder %s11, 0
      %p31 = por %p29, %p30
      %p32 = scmp.ne.s32.totalorder %s21, %s24
      %p33 = scmp.eq.s32.totalorder %s16, 1
      %p34 = por %p32, %p33
      %p35 = scmp.ne.s32.totalorder %s24, %s25
      %p36 = scmp.eq.s32.totalorder %s16, 0
      %p37 = por %p35, %p36
      %p38 = scmp.ne.s32.totalorder %s24, %s25
      %p39 = scmp.eq.s32.totalorder %s17, 1
      %p40 = por %p38, %p39
      %p42 = scmp.ne.s32.totalorder %s25, %s41
      %p43 = scmp.eq.s32.totalorder %s17, 0
      %p44 = por %p42, %p43
      %s45 = ssub.s32 %s11, %s18
      %p46 = scmp.eq.s32.totalorder %s45, 0
      %s48 = sadd.s32 %s47, 1
      %s49 = scalar_select %p46, %s47, %s48
      %p52 = pneg %p46
      %p53 = scmp.eq.s32.totalorder %s11, 1
      %p54 = por %p52, %p53
      %p55 = scmp.ne.s32.totalorder %s47, %s50
      %p56 = scmp.eq.s32.totalorder %s11, 0
      %p57 = por %p55, %p56
      %p58 = scmp.ne.s32.totalorder %s47, %s50
      %p59 = scmp.eq.s32.totalorder %s16, 1
      %p60 = por %p58, %p59
      %p61 = scmp.ne.s32.totalorder %s50, %s51
      %p62 = scmp.eq.s32.totalorder %s16, 0
      %p63 = por %p61, %p62
      %p64 = scmp.ne.s32.totalorder %s50, %s51
      %p65 = scmp.eq.s32.totalorder %s17, 1
      %p66 = por %p64, %p65
      %p68 = scmp.ne.s32.totalorder %s51, %s67
      %p69 = scmp.eq.s32.totalorder %s17, 0
      %p70 = por %p68, %p69
      %s71 = ssub.s32 %s11, %s18
      %p72 = scmp.eq.s32.totalorder %s71, 0
      %s74 = sadd.s32 %s73, 1
      %s75 = scalar_select %p72, %s73, %s74
      %p78 = pneg %p72
      %p79 = scmp.eq.s32.totalorder %s11, 1
      %p80 = por %p78, %p79
      %p81 = scmp.ne.s32.totalorder %s73, %s76
      %p82 = scmp.eq.s32.totalorder %s11, 0
      %p83 = por %p81, %p82
      %p84 = scmp.ne.s32.totalorder %s73, %s76
      %p85 = scmp.eq.s32.totalorder %s16, 1
      %p86 = por %p84, %p85
      %p87 = scmp.ne.s32.totalorder %s76, %s77
      %p88 = scmp.eq.s32.totalorder %s16, 0
      %p89 = por %p87, %p88
      %p90 = scmp.ne.s32.totalorder %s76, %s77
      %p91 = scmp.eq.s32.totalorder %s17, 1
      %p92 = por %p90, %p91
      %p94 = scmp.ne.s32.totalorder %s77, %s93
      %p95 = scmp.eq.s32.totalorder %s17, 0
      %p96 = por %p94, %p95
      %p97 = scmp.le.s32.totalorder 1, %s11
      %p98 = scmp.lt.s32.totalorder %s11, 3
      %p99 = pnand %p97, %p98
      %p100 = pneg %p99
      // Predicated region
      $region9: #{tpu_custom_call.1} parent=5 // pred_check
        _
      $region10: #{tpu_custom_call.1} parent=5 // pred_check_branch
        %102 = sbr.rel (%p99) target = $region12
      $region11: #{tpu_custom_call.1} parent=5 // pred_region
        %s103 = ssub.s32 %s11, 1
      $region12: #{tpu_custom_call.1} parent=5 // pred_fallthru
        _
      %p104 = scmp.lt.s32.totalorder %s11, 2
      // Predicated region
      $region13: #{tpu_custom_call.1} parent=5 // pred_check
        %p105 = pneg %p104
      $region14: #{tpu_custom_call.1} parent=5 // pred_check_branch
        %107 = sbr.rel (%p105) target = $region16
      $region15: #{tpu_custom_call.1} parent=5 // pred_region
        // Predicated region
        $region17: #{tpu_custom_call.1} parent=15 // pred_check
          %p108 = pneg %p31
        $region18: #{tpu_custom_call.1} parent=15 // pred_check_branch
          %110 = sbr.rel (%p108) target = $region20
        $region19: #{tpu_custom_call.1} parent=15 // pred_region
          %p111 = scmp.lt.s32.totalorder %s11, 1
          %s112 = scalar_select %p111, %s11, 1
          %s113 = smul.addr %s112, 8
          %s114 = scalar_lea.vmem %s0, %s113
        $region20: #{tpu_custom_call.1} parent=15 // pred_fallthru
          _
        // Predicated region
        $region21: #{tpu_custom_call.1} parent=15 // pred_check
          %p115 = pneg %p57
        $region22: #{tpu_custom_call.1} parent=15 // pred_check_branch
          %117 = sbr.rel (%p115) target = $region24
        $region23: #{tpu_custom_call.1} parent=15 // pred_region
          %p118 = scmp.lt.s32.totalorder %s11, 1
          %s119 = scalar_select %p118, %s11, 1
          %s120 = smul.addr %s119, 8
          %s121 = scalar_lea.vmem %s1, %s120
        $region24: #{tpu_custom_call.1} parent=15 // pred_fallthru
          _
      $region16: #{tpu_custom_call.1} parent=5 // pred_fallthru
        _
      %p122 = scmp.le.s32.totalorder 1, %s11
      %p123 = scmp.lt.s32.totalorder %s11, 3
      %p124 = pnand %p122, %p123
      %p125 = pneg %p124
      // Predicated region
      $region25: #{tpu_custom_call.1} parent=5 // pred_check
        _
      $region26: #{tpu_custom_call.1} parent=5 // pred_check_branch
        %127 = sbr.rel (%p124) target = $region28
      $region27: #{tpu_custom_call.1} parent=5 // pred_region
        %s128 = ssub.s32 %s11, 1
        %p129 = scmp.lt.s32.totalorder %s16, 1
        %s130 = scalar_select %p129, %s16, 1
        %s131 = smul.addr %s130, 8
        %s132 = scalar_lea.vmem %s0, %s131
        %p133 = pneg %p37
        %p134 = pneg %p34
        %p135 = scmp.lt.s32.totalorder %s16, 1
        %s136 = scalar_select %p135, %s16, 1
        %s137 = smul.addr %s136, 8
        %s138 = scalar_lea.vmem %s1, %s137
        %p139 = pneg %p63
        %p140 = pneg %p60
        %p141 = pneg %p89
        %p142 = pneg %p86
        %s143 = sand.u32 %s76, 1
        %s144 = scalar_lea.sflag [#allocation3], %s143
        %s145 = sand.u32 %s76, 1
        %s146 = smul.addr %s145, 8
        %s147 = scalar_lea.vmem [#allocation2], %s146
        %p148 = scmp.lt.s32.totalorder %s16, 1
        %s149 = scalar_select %p148, %s16, 1
        %s150 = smul.addr %s149, 8
        %s151 = scalar_lea.vmem %s0, %s150
        %p152 = scmp.lt.s32.totalorder %s16, 1
        %s153 = scalar_select %p152, %s16, 1
        %s154 = smul.addr %s153, 8
        %s155 = scalar_lea.vmem %s1, %s154
        %v156 = vld [vmem:[%s151] sm:$0xff]
        %v157 = vld [vmem:[%s155] sm:$0xff]
        %vm158 = vweird.f32 %v156
        %vm159 = vmxor %vm158, 1
        %v160 = vsel %vm159, 1, 0
        %v161 = vcvt.s32.f32 %v160
        %v162 = vsel %vm159, %v156, 0.0
        %v163 = vlaneseq
        %v164 = vand.u32 %v163, 127
        %165 = vset.pattern.permute.xlu0 0
        %166 = vperm.xlu0 %165, %v157
        %v167 = vpop.permute.xlu0 %166
        %vm168 = vcmp.eq.s32.totalorder %v164, %v167
        %v169 = vsel %vm168, %v162, 0.0
        %vm170 = vcmask 261120
        %v172 = vsel %vm170, %v161, 0
        %174 = vmatprep.subr.mxu0 0.0
        %175 = vmatpush1.msra.mxu0 1.0
        %176 = vmatprep.subr.mxu0 0.0
        %177 = vmatpush1.msra.mxu0 1.0
        %178 = vmatprep.subr.mxu0 0.0
        %179 = vmatpush1.msra.mxu0 1.0
        %180 = vmatprep.subr.mxu0 0.0
        %181 = vmatpush1.msra.mxu0 1.0
        %182 = vmatprep.subr.mxu0 0.0
        %183 = vmatpush1.msra.mxu0 0.0
        %184 = vmatprep.subr.mxu0 0.0
        %185 = vmatpush1.msra.mxu0 0.0
        %186 = vmatprep.subr.mxu0 0.0
        %187 = vmatpush1.msra.mxu0 0.0
        %188 = vmatprep.subr.mxu0 0.0
        %189 = vmatpush1.msra.mxu0 0.0
        %190 = vmatprep.subr.mxu0 0.0
        %191 = vmatpush1.msra.mxu0 0.0
        %192 = vmatprep.subr.mxu0 0.0
        %193 = vmatpush1.msra.mxu0 0.0
        %194 = vmatprep.subr.mxu0 0.0
        %195 = vmatpush1.msra.mxu0 0.0
        %196 = vmatprep.subr.mxu0 0.0
        %197 = vmatpush1.msra.mxu0 0.0
        %198 = vmatprep.subr.mxu0 0.0
        %199 = vmatpush1.msra.mxu0 0.0
        %200 = vmatprep.subr.mxu0 0.0
        %201 = vmatpush1.msra.mxu0 0.0
        %202 = vmatprep.subr.mxu0 0.0
        %203 = vmatpush1.msra.mxu0 0.0
        %204 = vmatprep.subr.mxu0 0.0
        %205 = vmatpush1.msra.mxu0 0.0
        %206 = vmatprep.subr.mxu0 0.0
        %207 = vmatpush1.msra.mxu0 0.0
        %208 = vmatprep.subr.mxu0 0.0
        %209 = vmatpush1.msra.mxu0 0.0
        %210 = vmatprep.subr.mxu0 0.0
        %211 = vmatpush1.msra.mxu0 0.0
        %212 = vmatprep.subr.mxu0 0.0
        %213 = vmatpush1.msra.mxu0 0.0
        %214 = vmatprep.subr.mxu0 0.0
        %215 = vmatpush1.msra.mxu0 0.0
        %216 = vmatprep.subr.mxu0 0.0
        %217 = vmatpush1.msra.mxu0 0.0
        %218 = vmatprep.subr.mxu0 0.0
        %219 = vmatpush1.msra.mxu0 0.0
        %220 = vmatprep.subr.mxu0 0.0
        %221 = vmatpush1.msra.mxu0 0.0
        %222 = vmatprep.subr.mxu0 0.0
        %223 = vmatpush1.msra.mxu0 0.0
        %224 = vmatprep.subr.mxu0 0.0
        %225 = vmatpush1.msra.mxu0 0.0
        %226 = vmatprep.subr.mxu0 0.0
        %227 = vmatpush1.msra.mxu0 0.0
        %228 = vmatprep.subr.mxu0 0.0
        %229 = vmatpush1.msra.mxu0 0.0
        %230 = vmatprep.subr.mxu0 0.0
        %231 = vmatpush1.msra.mxu0 0.0
        %232 = vmatprep.subr.mxu0 0.0
        %233 = vmatpush1.msra.mxu0 0.0
        %234 = vmatprep.subr.mxu0 0.0
        %235 = vmatpush1.msra.mxu0 0.0
        %236 = vmatprep.subr.mxu0 0.0
        %237 = vmatpush1.msra.mxu0 0.0
        %238 = vmatprep.mubr.f32.mxu0 0.0
        %v239 = vand.u32 %v172, 4294901760
        %v240 = vsub.f32 %v172, %v239
        %v241 = vand.u32 %v240, 4294901760
        %v242 = vsub.f32 %v240, %v241
        %v243 = vand.u32 %v242, 4294901760
        %244 = vmatmul.mubr.f32.gmra.mrb[0].mxu0 %v243
        %v245 = vpop.f32.mrb[0].mxu0
        %v246 = vadd.f32 0.0, %v245
        %v247 = vpop.f32.mrb[0].mxu0
        %248 = vdwg.mxu0
        %249 = vmatprep.subr.mxu0 0.0
        %250 = vmatpush1.msra.mxu0 0.0
        %251 = vmatprep.subr.mxu0 0.0
        %252 = vmatpush1.msra.mxu0 0.0
        %253 = vmatprep.subr.mxu0 0.0
        %254 = vmatpush1.msra.mxu0 0.0
        %255 = vmatprep.subr.mxu0 0.0
        %256 = vmatpush1.msra.mxu0 0.0
        %257 = vmatprep.subr.mxu0 0.0
        %258 = vmatpush1.msra.mxu0 0.0
        %259 = vmatprep.subr.mxu0 0.0
        %260 = vmatpush1.msra.mxu0 0.0
        %261 = vmatprep.subr.mxu0 0.0
        %262 = vmatpush1.msra.mxu0 0.0
        %263 = vmatprep.subr.mxu0 0.0
        %264 = vmatpush1.msra.mxu0 0.0
        %265 = vmatprep.subr.mxu0 0.0
        %266 = vmatpush1.msra.mxu0 0.0
        %267 = vmatprep.subr.mxu0 0.0
        %268 = vmatpush1.msra.mxu0 0.0
        %269 = vmatprep.subr.mxu0 0.0
        %270 = vmatpush1.msra.mxu0 0.0
        %271 = vmatprep.subr.mxu0 0.0
        %272 = vmatpush1.msra.mxu0 0.0
        %273 = vmatprep.subr.mxu0 0.0
        %274 = vmatpush1.msra.mxu0 0.0
        %275 = vmatprep.subr.mxu0 0.0
        %276 = vmatpush1.msra.mxu0 0.0
        %277 = vmatprep.subr.mxu0 0.0
        %278 = vmatpush1.msra.mxu0 0.0
        %279 = vmatprep.subr.mxu0 0.0
        %280 = vmatpush1.msra.mxu0 0.0
        %281 = vmatprep.subr.mxu0 0.0
        %282 = vmatpush1.msra.mxu0 0.0
        %283 = vmatprep.subr.mxu0 0.0
        %284 = vmatpush1.msra.mxu0 0.0
        %285 = vmatprep.subr.mxu0 0.0
        %286 = vmatpush1.msra.mxu0 0.0
        %287 = vmatprep.subr.mxu0 0.0
        %288 = vmatpush1.msra.mxu0 0.0
        %289 = vmatprep.subr.mxu0 0.0
        %290 = vmatpush1.msra.mxu0 0.0
        %291 = vmatprep.subr.mxu0 0.0
        %292 = vmatpush1.msra.mxu0 0.0
        %293 = vmatprep.subr.mxu0 0.0
        %294 = vmatpush1.msra.mxu0 0.0
        %295 = vmatprep.subr.mxu0 0.0
        %296 = vmatpush1.msra.mxu0 0.0
        %297 = vmatprep.subr.mxu0 0.0
        %298 = vmatpush1.msra.mxu0 0.0
        %299 = vmatprep.subr.mxu0 0.0
        %300 = vmatpush1.msra.mxu0 0.0
        %301 = vmatprep.subr.mxu0 0.0
        %302 = vmatpush1.msra.mxu0 0.0
        %303 = vmatprep.subr.mxu0 0.0
        %304 = vmatpush1.msra.mxu0 0.0
        %305 = vmatprep.subr.mxu0 0.0
        %306 = vmatpush1.msra.mxu0 0.0
        %307 = vmatprep.subr.mxu0 0.0
        %308 = vmatpush1.msra.mxu0 0.0
        %309 = vmatprep.subr.mxu0 0.0
        %310 = vmatpush1.msra.mxu0 0.0
        %311 = vmatprep.subr.mxu0 0.0
        %312 = vmatpush1.msra.mxu0 0.0
        %313 = vmatprep.mubr.f32.mxu0 0.0
        %v314 = vand.u32 %v172, 4294901760
        %315 = vmatmul.mubr.f32.gmra.mrb[0].mxu0 %v314
        %v316 = vpop.f32.mrb[0].mxu0
        %v317 = vadd.f32 %v246, %v316
        %v318 = vpop.f32.mrb[0].mxu0
        %319 = vdwg.mxu0
        %320 = vmatprep.subr.mxu0 0.0
        %321 = vmatpush1.msra.mxu0 0.0
        %322 = vmatprep.subr.mxu0 0.0
        %323 = vmatpush1.msra.mxu0 0.0
        %324 = vmatprep.subr.mxu0 0.0
        %325 = vmatpush1.msra.mxu0 0.0
        %326 = vmatprep.subr.mxu0 0.0
        %327 = vmatpush1.msra.mxu0 0.0
        %328 = vmatprep.subr.mxu0 0.0
        %329 = vmatpush1.msra.mxu0 0.0
        %330 = vmatprep.subr.mxu0 0.0
        %331 = vmatpush1.msra.mxu0 0.0
        %332 = vmatprep.subr.mxu0 0.0
        %333 = vmatpush1.msra.mxu0 0.0
        %334 = vmatprep.subr.mxu0 0.0
        %335 = vmatpush1.msra.mxu0 0.0
        %336 = vmatprep.subr.mxu0 0.0
        %337 = vmatpush1.msra.mxu0 0.0
        %338 = vmatprep.subr.mxu0 0.0
        %339 = vmatpush1.msra.mxu0 0.0
        %340 = vmatprep.subr.mxu0 0.0
        %341 = vmatpush1.msra.mxu0 0.0
        %342 = vmatprep.subr.mxu0 0.0
        %343 = vmatpush1.msra.mxu0 0.0
        %344 = vmatprep.subr.mxu0 0.0
        %345 = vmatpush1.msra.mxu0 0.0
        %346 = vmatprep.subr.mxu0 0.0
        %347 = vmatpush1.msra.mxu0 0.0
        %348 = vmatprep.subr.mxu0 0.0
        %349 = vmatpush1.msra.mxu0 0.0
        %350 = vmatprep.subr.mxu0 0.0
        %351 = vmatpush1.msra.mxu0 0.0
        %352 = vmatprep.subr.mxu0 0.0
        %353 = vmatpush1.msra.mxu0 0.0
        %354 = vmatprep.subr.mxu0 0.0
        %355 = vmatpush1.msra.mxu0 0.0
        %356 = vmatprep.subr.mxu0 0.0
        %357 = vmatpush1.msra.mxu0 0.0
        %358 = vmatprep.subr.mxu0 0.0
        %359 = vmatpush1.msra.mxu0 0.0
        %360 = vmatprep.subr.mxu0 0.0
        %361 = vmatpush1.msra.mxu0 0.0
        %362 = vmatprep.subr.mxu0 0.0
        %363 = vmatpush1.msra.mxu0 0.0
        %364 = vmatprep.subr.mxu0 0.0
        %365 = vmatpush1.msra.mxu0 0.0
        %366 = vmatprep.subr.mxu0 0.0
        %367 = vmatpush1.msra.mxu0 0.0
        %368 = vmatprep.subr.mxu0 0.0
        %369 = vmatpush1.msra.mxu0 0.0
        %370 = vmatprep.subr.mxu0 0.0
        %371 = vmatpush1.msra.mxu0 0.0
        %372 = vmatprep.subr.mxu0 0.0
        %373 = vmatpush1.msra.mxu0 0.0
        %374 = vmatprep.subr.mxu0 0.0
        %375 = vmatpush1.msra.mxu0 0.0
        %376 = vmatprep.subr.mxu0 0.0
        %377 = vmatpush1.msra.mxu0 0.0
        %378 = vmatprep.subr.mxu0 0.0
        %379 = vmatpush1.msra.mxu0 0.0
        %380 = vmatprep.subr.mxu0 0.0
        %381 = vmatpush1.msra.mxu0 0.0
        %382 = vmatprep.subr.mxu0 0.0
        %383 = vmatpush1.msra.mxu0 0.0
        %384 = vmatprep.mubr.f32.mxu0 0.0
        %v385 = vand.u32 %v172, 4294901760
        %v386 = vsub.f32 %v172, %v385
        %387 = vmatmul.mubr.f32.gmra.mrb[0].mxu0 %v386
        %v388 = vpop.f32.mrb[0].mxu0
        %v389 = vadd.f32 %v317, %v388
        %v390 = vpop.f32.mrb[0].mxu0
        %391 = vdwg.mxu0
        %392 = vmatprep.subr.mxu0 0.0
        %393 = vmatpush1.msra.mxu0 1.0
        %394 = vmatprep.subr.mxu0 0.0
        %395 = vmatpush1.msra.mxu0 1.0
        %396 = vmatprep.subr.mxu0 0.0
        %397 = vmatpush1.msra.mxu0 1.0
        %398 = vmatprep.subr.mxu0 0.0
        %399 = vmatpush1.msra.mxu0 1.0
        %400 = vmatprep.subr.mxu0 0.0
        %401 = vmatpush1.msra.mxu0 0.0
        %402 = vmatprep.subr.mxu0 0.0
        %403 = vmatpush1.msra.mxu0 0.0
        %404 = vmatprep.subr.mxu0 0.0
        %405 = vmatpush1.msra.mxu0 0.0
        %406 = vmatprep.subr.mxu0 0.0
        %407 = vmatpush1.msra.mxu0 0.0
        %408 = vmatprep.subr.mxu0 0.0
        %409 = vmatpush1.msra.mxu0 0.0
        %410 = vmatprep.subr.mxu0 0.0
        %411 = vmatpush1.msra.mxu0 0.0
        %412 = vmatprep.subr.mxu0 0.0
        %413 = vmatpush1.msra.mxu0 0.0
        %414 = vmatprep.subr.mxu0 0.0
        %415 = vmatpush1.msra.mxu0 0.0
        %416 = vmatprep.subr.mxu0 0.0
        %417 = vmatpush1.msra.mxu0 0.0
        %418 = vmatprep.subr.mxu0 0.0
        %419 = vmatpush1.msra.mxu0 0.0
        %420 = vmatprep.subr.mxu0 0.0
        %421 = vmatpush1.msra.mxu0 0.0
        %422 = vmatprep.subr.mxu0 0.0
        %423 = vmatpush1.msra.mxu0 0.0
        %424 = vmatprep.subr.mxu0 0.0
        %425 = vmatpush1.msra.mxu0 0.0
        %426 = vmatprep.subr.mxu0 0.0
        %427 = vmatpush1.msra.mxu0 0.0
        %428 = vmatprep.subr.mxu0 0.0
        %429 = vmatpush1.msra.mxu0 0.0
        %430 = vmatprep.subr.mxu0 0.0
        %431 = vmatpush1.msra.mxu0 0.0
        %432 = vmatprep.subr.mxu0 0.0
        %433 = vmatpush1.msra.mxu0 0.0
        %434 = vmatprep.subr.mxu0 0.0
        %435 = vmatpush1.msra.mxu0 0.0
        %436 = vmatprep.subr.mxu0 0.0
        %437 = vmatpush1.msra.mxu0 0.0
        %438 = vmatprep.subr.mxu0 0.0
        %439 = vmatpush1.msra.mxu0 0.0
        %440 = vmatprep.subr.mxu0 0.0
        %441 = vmatpush1.msra.mxu0 0.0
        %442 = vmatprep.subr.mxu0 0.0
        %443 = vmatpush1.msra.mxu0 0.0
        %444 = vmatprep.subr.mxu0 0.0
        %445 = vmatpush1.msra.mxu0 0.0
        %446 = vmatprep.subr.mxu0 0.0
        %447 = vmatpush1.msra.mxu0 0.0
        %448 = vmatprep.subr.mxu0 0.0
        %449 = vmatpush1.msra.mxu0 0.0
        %450 = vmatprep.subr.mxu0 0.0
        %451 = vmatpush1.msra.mxu0 0.0
        %452 = vmatprep.subr.mxu0 0.0
        %453 = vmatpush1.msra.mxu0 0.0
        %454 = vmatprep.subr.mxu0 0.0
        %455 = vmatpush1.msra.mxu0 0.0
        %456 = vmatprep.mubr.f32.mxu0 0.0
        %v457 = vand.u32 %v172, 4294901760
        %v458 = vsub.f32 %v172, %v457
        %v459 = vand.u32 %v458, 4294901760
        %460 = vmatmul.mubr.f32.gmra.mrb[0].mxu0 %v459
        %v461 = vpop.f32.mrb[0].mxu0
        %v462 = vadd.f32 %v389, %v461
        %v463 = vpop.f32.mrb[0].mxu0
        %464 = vdwg.mxu0
        %465 = vmatprep.subr.mxu0 0.0
        %466 = vmatpush1.msra.mxu0 0.0
        %467 = vmatprep.subr.mxu0 0.0
        %468 = vmatpush1.msra.mxu0 0.0
        %469 = vmatprep.subr.mxu0 0.0
        %470 = vmatpush1.msra.mxu0 0.0
        %471 = vmatprep.subr.mxu0 0.0
        %472 = vmatpush1.msra.mxu0 0.0
        %473 = vmatprep.subr.mxu0 0.0
        %474 = vmatpush1.msra.mxu0 0.0
        %475 = vmatprep.subr.mxu0 0.0
        %476 = vmatpush1.msra.mxu0 0.0
        %477 = vmatprep.subr.mxu0 0.0
        %478 = vmatpush1.msra.mxu0 0.0
        %479 = vmatprep.subr.mxu0 0.0
        %480 = vmatpush1.msra.mxu0 0.0
        %481 = vmatprep.subr.mxu0 0.0
        %482 = vmatpush1.msra.mxu0 0.0
        %483 = vmatprep.subr.mxu0 0.0
        %484 = vmatpush1.msra.mxu0 0.0
        %485 = vmatprep.subr.mxu0 0.0
        %486 = vmatpush1.msra.mxu0 0.0
        %487 = vmatprep.subr.mxu0 0.0
        %488 = vmatpush1.msra.mxu0 0.0
        %489 = vmatprep.subr.mxu0 0.0
        %490 = vmatpush1.msra.mxu0 0.0
        %491 = vmatprep.subr.mxu0 0.0
        %492 = vmatpush1.msra.mxu0 0.0
        %493 = vmatprep.subr.mxu0 0.0
        %494 = vmatpush1.msra.mxu0 0.0
        %495 = vmatprep.subr.mxu0 0.0
        %496 = vmatpush1.msra.mxu0 0.0
        %497 = vmatprep.subr.mxu0 0.0
        %498 = vmatpush1.msra.mxu0 0.0
        %499 = vmatprep.subr.mxu0 0.0
        %500 = vmatpush1.msra.mxu0 0.0
        %501 = vmatprep.subr.mxu0 0.0
        %502 = vmatpush1.msra.mxu0 0.0
        %503 = vmatprep.subr.mxu0 0.0
        %504 = vmatpush1.msra.mxu0 0.0
        %505 = vmatprep.subr.mxu0 0.0
        %506 = vmatpush1.msra.mxu0 0.0
        %507 = vmatprep.subr.mxu0 0.0
        %508 = vmatpush1.msra.mxu0 0.0
        %509 = vmatprep.subr.mxu0 0.0
        %510 = vmatpush1.msra.mxu0 0.0
        %511 = vmatprep.subr.mxu0 0.0
        %512 = vmatpush1.msra.mxu0 0.0
        %513 = vmatprep.subr.mxu0 0.0
        %514 = vmatpush1.msra.mxu0 0.0
        %515 = vmatprep.subr.mxu0 0.0
        %516 = vmatpush1.msra.mxu0 0.0
        %517 = vmatprep.subr.mxu0 0.0
        %518 = vmatpush1.msra.mxu0 0.0
        %519 = vmatprep.subr.mxu0 0.0
        %520 = vmatpush1.msra.mxu0 0.0
        %521 = vmatprep.subr.mxu0 0.0
        %522 = vmatpush1.msra.mxu0 0.0
        %523 = vmatprep.subr.mxu0 0.0
        %524 = vmatpush1.msra.mxu0 0.0
        %525 = vmatprep.subr.mxu0 0.0
        %526 = vmatpush1.msra.mxu0 0.0
        %527 = vmatprep.subr.mxu0 0.0
        %528 = vmatpush1.msra.mxu0 0.0
        %529 = vmatprep.mubr.f32.mxu0 0.0
        %v530 = vand.u32 %v172, 4294901760
        %531 = vmatmul.mubr.f32.gmra.mrb[0].mxu0 %v530
        %v532 = vpop.f32.mrb[0].mxu0
        %v533 = vadd.f32 %v462, %v532
        %v534 = vpop.f32.mrb[0].mxu0
        %535 = vdwg.mxu0
        %536 = vmatprep.subr.mxu0 0.0
        %537 = vmatpush1.msra.mxu0 1.0
        %538 = vmatprep.subr.mxu0 0.0
        %539 = vmatpush1.msra.mxu0 1.0
        %540 = vmatprep.subr.mxu0 0.0
        %541 = vmatpush1.msra.mxu0 1.0
        %542 = vmatprep.subr.mxu0 0.0
        %543 = vmatpush1.msra.mxu0 1.0
        %544 = vmatprep.subr.mxu0 0.0
        %545 = vmatpush1.msra.mxu0 0.0
        %546 = vmatprep.subr.mxu0 0.0
        %547 = vmatpush1.msra.mxu0 0.0
        %548 = vmatprep.subr.mxu0 0.0
        %549 = vmatpush1.msra.mxu0 0.0
        %550 = vmatprep.subr.mxu0 0.0
        %551 = vmatpush1.msra.mxu0 0.0
        %552 = vmatprep.subr.mxu0 0.0
        %553 = vmatpush1.msra.mxu0 0.0
        %554 = vmatprep.subr.mxu0 0.0
        %555 = vmatpush1.msra.mxu0 0.0
        %556 = vmatprep.subr.mxu0 0.0
        %557 = vmatpush1.msra.mxu0 0.0
        %558 = vmatprep.subr.mxu0 0.0
        %559 = vmatpush1.msra.mxu0 0.0
        %560 = vmatprep.subr.mxu0 0.0
        %561 = vmatpush1.msra.mxu0 0.0
        %562 = vmatprep.subr.mxu0 0.0
        %563 = vmatpush1.msra.mxu0 0.0
        %564 = vmatprep.subr.mxu0 0.0
        %565 = vmatpush1.msra.mxu0 0.0
        %566 = vmatprep.subr.mxu0 0.0
        %567 = vmatpush1.msra.mxu0 0.0
        %568 = vmatprep.subr.mxu0 0.0
        %569 = vmatpush1.msra.mxu0 0.0
        %570 = vmatprep.subr.mxu0 0.0
        %571 = vmatpush1.msra.mxu0 0.0
        %572 = vmatprep.subr.mxu0 0.0
        %573 = vmatpush1.msra.mxu0 0.0
        %574 = vmatprep.subr.mxu0 0.0
        %575 = vmatpush1.msra.mxu0 0.0
        %576 = vmatprep.subr.mxu0 0.0
        %577 = vmatpush1.msra.mxu0 0.0
        %578 = vmatprep.subr.mxu0 0.0
        %579 = vmatpush1.msra.mxu0 0.0
        %580 = vmatprep.subr.mxu0 0.0
        %581 = vmatpush1.msra.mxu0 0.0
        %582 = vmatprep.subr.mxu0 0.0
        %583 = vmatpush1.msra.mxu0 0.0
        %584 = vmatprep.subr.mxu0 0.0
        %585 = vmatpush1.msra.mxu0 0.0
        %586 = vmatprep.subr.mxu0 0.0
        %587 = vmatpush1.msra.mxu0 0.0
        %588 = vmatprep.subr.mxu0 0.0
        %589 = vmatpush1.msra.mxu0 0.0
        %590 = vmatprep.subr.mxu0 0.0
        %591 = vmatpush1.msra.mxu0 0.0
        %592 = vmatprep.subr.mxu0 0.0
        %593 = vmatpush1.msra.mxu0 0.0
        %594 = vmatprep.subr.mxu0 0.0
        %595 = vmatpush1.msra.mxu0 0.0
        %596 = vmatprep.subr.mxu0 0.0
        %597 = vmatpush1.msra.mxu0 0.0
        %598 = vmatprep.subr.mxu0 0.0
        %599 = vmatpush1.msra.mxu0 0.0
        %600 = vmatprep.mubr.f32.mxu0 0.0
        %v601 = vand.u32 %v172, 4294901760
        %602 = vmatmul.mubr.f32.gmra.mrb[0].mxu0 %v601
        %v603 = vpop.f32.mrb[0].mxu0
        %v604 = vadd.f32 %v533, %v603
        %v605 = vpop.f32.mrb[0].mxu0
        %606 = vdwg.mxu0
        %v608 = vsel %vm170, %v162, 0
        %610 = vmatprep.subr.mxu0 0.0
        %611 = vmatpush1.msra.mxu0 1.0
        %612 = vmatprep.subr.mxu0 0.0
        %613 = vmatpush1.msra.mxu0 1.0
        %614 = vmatprep.subr.mxu0 0.0
        %615 = vmatpush1.msra.mxu0 1.0
        %616 = vmatprep.subr.mxu0 0.0
        %617 = vmatpush1.msra.mxu0 1.0
        %618 = vmatprep.subr.mxu0 0.0
        %619 = vmatpush1.msra.mxu0 0.0
        %620 = vmatprep.subr.mxu0 0.0
        %621 = vmatpush1.msra.mxu0 0.0
        %622 = vmatprep.subr.mxu0 0.0
        %623 = vmatpush1.msra.mxu0 0.0
        %624 = vmatprep.subr.mxu0 0.0
        %625 = vmatpush1.msra.mxu0 0.0
        %626 = vmatprep.subr.mxu0 0.0
        %627 = vmatpush1.msra.mxu0 0.0
        %628 = vmatprep.subr.mxu0 0.0
        %629 = vmatpush1.msra.mxu0 0.0
        %630 = vmatprep.subr.mxu0 0.0
        %631 = vmatpush1.msra.mxu0 0.0
        %632 = vmatprep.subr.mxu0 0.0
        %633 = vmatpush1.msra.mxu0 0.0
        %634 = vmatprep.subr.mxu0 0.0
        %635 = vmatpush1.msra.mxu0 0.0
        %636 = vmatprep.subr.mxu0 0.0
        %637 = vmatpush1.msra.mxu0 0.0
        %638 = vmatprep.subr.mxu0 0.0
        %639 = vmatpush1.msra.mxu0 0.0
        %640 = vmatprep.subr.mxu0 0.0
        %641 = vmatpush1.msra.mxu0 0.0
        %642 = vmatprep.subr.mxu0 0.0
        %643 = vmatpush1.msra.mxu0 0.0
        %644 = vmatprep.subr.mxu0 0.0
        %645 = vmatpush1.msra.mxu0 0.0
        %646 = vmatprep.subr.mxu0 0.0
        %647 = vmatpush1.msra.mxu0 0.0
        %648 = vmatprep.subr.mxu0 0.0
        %649 = vmatpush1.msra.mxu0 0.0
        %650 = vmatprep.subr.mxu0 0.0
        %651 = vmatpush1.msra.mxu0 0.0
        %652 = vmatprep.subr.mxu0 0.0
        %653 = vmatpush1.msra.mxu0 0.0
        %654 = vmatprep.subr.mxu0 0.0
        %655 = vmatpush1.msra.mxu0 0.0
        %656 = vmatprep.subr.mxu0 0.0
        %657 = vmatpush1.msra.mxu0 0.0
        %658 = vmatprep.subr.mxu0 0.0
        %659 = vmatpush1.msra.mxu0 0.0
        %660 = vmatprep.subr.mxu0 0.0
        %661 = vmatpush1.msra.mxu0 0.0
        %662 = vmatprep.subr.mxu0 0.0
        %663 = vmatpush1.msra.mxu0 0.0
        %664 = vmatprep.subr.mxu0 0.0
        %665 = vmatpush1.msra.mxu0 0.0
        %666 = vmatprep.subr.mxu0 0.0
        %667 = vmatpush1.msra.mxu0 0.0
        %668 = vmatprep.subr.mxu0 0.0
        %669 = vmatpush1.msra.mxu0 0.0
        %670 = vmatprep.subr.mxu0 0.0
        %671 = vmatpush1.msra.mxu0 0.0
        %672 = vmatprep.subr.mxu0 0.0
        %673 = vmatpush1.msra.mxu0 0.0
        %674 = vmatprep.mubr.f32.mxu0 0.0
        %v675 = vand.u32 %v608, 4294901760
        %v676 = vsub.f32 %v608, %v675
        %v677 = vand.u32 %v676, 4294901760
        %v678 = vsub.f32 %v676, %v677
        %v679 = vand.u32 %v678, 4294901760
        %680 = vmatmul.mubr.f32.gmra.mrb[0].mxu0 %v679
        %v681 = vpop.f32.mrb[0].mxu0
        %v682 = vadd.f32 0.0, %v681
        %v683 = vpop.f32.mrb[0].mxu0
        %684 = vdwg.mxu0
        %685 = vmatprep.subr.mxu0 0.0
        %686 = vmatpush1.msra.mxu0 0.0
        %687 = vmatprep.subr.mxu0 0.0
        %688 = vmatpush1.msra.mxu0 0.0
        %689 = vmatprep.subr.mxu0 0.0
        %690 = vmatpush1.msra.mxu0 0.0
        %691 = vmatprep.subr.mxu0 0.0
        %692 = vmatpush1.msra.mxu0 0.0
        %693 = vmatprep.subr.mxu0 0.0
        %694 = vmatpush1.msra.mxu0 0.0
        %695 = vmatprep.subr.mxu0 0.0
        %696 = vmatpush1.msra.mxu0 0.0
        %697 = vmatprep.subr.mxu0 0.0
        %698 = vmatpush1.msra.mxu0 0.0
        %699 = vmatprep.subr.mxu0 0.0
        %700 = vmatpush1.msra.mxu0 0.0
        %701 = vmatprep.subr.mxu0 0.0
        %702 = vmatpush1.msra.mxu0 0.0
        %703 = vmatprep.subr.mxu0 0.0
        %704 = vmatpush1.msra.mxu0 0.0
        %705 = vmatprep.subr.mxu0 0.0
        %706 = vmatpush1.msra.mxu0 0.0
        %707 = vmatprep.subr.mxu0 0.0
        %708 = vmatpush1.msra.mxu0 0.0
        %709 = vmatprep.subr.mxu0 0.0
        %710 = vmatpush1.msra.mxu0 0.0
        %711 = vmatprep.subr.mxu0 0.0
        %712 = vmatpush1.msra.mxu0 0.0
        %713 = vmatprep.subr.mxu0 0.0
        %714 = vmatpush1.msra.mxu0 0.0
        %715 = vmatprep.subr.mxu0 0.0
        %716 = vmatpush1.msra.mxu0 0.0
        %717 = vmatprep.subr.mxu0 0.0
        %718 = vmatpush1.msra.mxu0 0.0
        %719 = vmatprep.subr.mxu0 0.0
        %720 = vmatpush1.msra.mxu0 0.0
        %721 = vmatprep.subr.mxu0 0.0
        %722 = vmatpush1.msra.mxu0 0.0
        %723 = vmatprep.subr.mxu0 0.0
        %724 = vmatpush1.msra.mxu0 0.0
        %725 = vmatprep.subr.mxu0 0.0
        %726 = vmatpush1.msra.mxu0 0.0
        %727 = vmatprep.subr.mxu0 0.0
        %728 = vmatpush1.msra.mxu0 0.0
        %729 = vmatprep.subr.mxu0 0.0
        %730 = vmatpush1.msra.mxu0 0.0
        %731 = vmatprep.subr.mxu0 0.0
        %732 = vmatpush1.msra.mxu0 0.0
        %733 = vmatprep.subr.mxu0 0.0
        %734 = vmatpush1.msra.mxu0 0.0
        %735 = vmatprep.subr.mxu0 0.0
        %736 = vmatpush1.msra.mxu0 0.0
        %737 = vmatprep.subr.mxu0 0.0
        %738 = vmatpush1.msra.mxu0 0.0
        %739 = vmatprep.subr.mxu0 0.0
        %740 = vmatpush1.msra.mxu0 0.0
        %741 = vmatprep.subr.mxu0 0.0
        %742 = vmatpush1.msra.mxu0 0.0
        %743 = vmatprep.subr.mxu0 0.0
        %744 = vmatpush1.msra.mxu0 0.0
        %745 = vmatprep.subr.mxu0 0.0
        %746 = vmatpush1.msra.mxu0 0.0
        %747 = vmatprep.subr.mxu0 0.0
        %748 = vmatpush1.msra.mxu0 0.0
        %749 = vmatprep.mubr.f32.mxu0 0.0
        %v750 = vand.u32 %v608, 4294901760
        %751 = vmatmul.mubr.f32.gmra.mrb[0].mxu0 %v750
        %v752 = vpop.f32.mrb[0].mxu0
        %v753 = vadd.f32 %v682, %v752
        %v754 = vpop.f32.mrb[0].mxu0
        %755 = vdwg.mxu0
        %756 = vmatprep.subr.mxu0 0.0
        %757 = vmatpush1.msra.mxu0 0.0
        %758 = vmatprep.subr.mxu0 0.0
        %759 = vmatpush1.msra.mxu0 0.0
        %760 = vmatprep.subr.mxu0 0.0
        %761 = vmatpush1.msra.mxu0 0.0
        %762 = vmatprep.subr.mxu0 0.0
        %763 = vmatpush1.msra.mxu0 0.0
        %764 = vmatprep.subr.mxu0 0.0
        %765 = vmatpush1.msra.mxu0 0.0
        %766 = vmatprep.subr.mxu0 0.0
        %767 = vmatpush1.msra.mxu0 0.0
        %768 = vmatprep.subr.mxu0 0.0
        %769 = vmatpush1.msra.mxu0 0.0
        %770 = vmatprep.subr.mxu0 0.0
        %771 = vmatpush1.msra.mxu0 0.0
        %772 = vmatprep.subr.mxu0 0.0
        %773 = vmatpush1.msra.mxu0 0.0
        %774 = vmatprep.subr.mxu0 0.0
        %775 = vmatpush1.msra.mxu0 0.0
        %776 = vmatprep.subr.mxu0 0.0
        %777 = vmatpush1.msra.mxu0 0.0
        %778 = vmatprep.subr.mxu0 0.0
        %779 = vmatpush1.msra.mxu0 0.0
        %780 = vmatprep.subr.mxu0 0.0
        %781 = vmatpush1.msra.mxu0 0.0
        %782 = vmatprep.subr.mxu0 0.0
        %783 = vmatpush1.msra.mxu0 0.0
        %784 = vmatprep.subr.mxu0 0.0
        %785 = vmatpush1.msra.mxu0 0.0
        %786 = vmatprep.subr.mxu0 0.0
        %787 = vmatpush1.msra.mxu0 0.0
        %788 = vmatprep.subr.mxu0 0.0
        %789 = vmatpush1.msra.mxu0 0.0
        %790 = vmatprep.subr.mxu0 0.0
        %791 = vmatpush1.msra.mxu0 0.0
        %792 = vmatprep.subr.mxu0 0.0
        %793 = vmatpush1.msra.mxu0 0.0
        %794 = vmatprep.subr.mxu0 0.0
        %795 = vmatpush1.msra.mxu0 0.0
        %796 = vmatprep.subr.mxu0 0.0
        %797 = vmatpush1.msra.mxu0 0.0
        %798 = vmatprep.subr.mxu0 0.0
        %799 = vmatpush1.msra.mxu0 0.0
        %800 = vmatprep.subr.mxu0 0.0
        %801 = vmatpush1.msra.mxu0 0.0
        %802 = vmatprep.subr.mxu0 0.0
        %803 = vmatpush1.msra.mxu0 0.0
        %804 = vmatprep.subr.mxu0 0.0
        %805 = vmatpush1.msra.mxu0 0.0
        %806 = vmatprep.subr.mxu0 0.0
        %807 = vmatpush1.msra.mxu0 0.0
        %808 = vmatprep.subr.mxu0 0.0
        %809 = vmatpush1.msra.mxu0 0.0
        %810 = vmatprep.subr.mxu0 0.0
        %811 = vmatpush1.msra.mxu0 0.0
        %812 = vmatprep.subr.mxu0 0.0
        %813 = vmatpush1.msra.mxu0 0.0
        %814 = vmatprep.subr.mxu0 0.0
        %815 = vmatpush1.msra.mxu0 0.0
        %816 = vmatprep.subr.mxu0 0.0
        %817 = vmatpush1.msra.mxu0 0.0
        %818 = vmatprep.subr.mxu0 0.0
        %819 = vmatpush1.msra.mxu0 0.0
        %820 = vmatprep.mubr.f32.mxu0 0.0
        %v821 = vand.u32 %v608, 4294901760
        %v822 = vsub.f32 %v608, %v821
        %823 = vmatmul.mubr.f32.gmra.mrb[0].mxu0 %v822
        %v824 = vpop.f32.mrb[0].mxu0
        %v825 = vadd.f32 %v753, %v824
        %v826 = vpop.f32.mrb[0].mxu0
        %827 = vdwg.mxu0
        %828 = vmatprep.subr.mxu0 0.0
        %829 = vmatpush1.msra.mxu0 1.0
        %830 = vmatprep.subr.mxu0 0.0
        %831 = vmatpush1.msra.mxu0 1.0
        %832 = vmatprep.subr.mxu0 0.0
        %833 = vmatpush1.msra.mxu0 1.0
        %834 = vmatprep.subr.mxu0 0.0
        %835 = vmatpush1.msra.mxu0 1.0
        %836 = vmatprep.subr.mxu0 0.0
        %837 = vmatpush1.msra.mxu0 0.0
        %838 = vmatprep.subr.mxu0 0.0
        %839 = vmatpush1.msra.mxu0 0.0
        %840 = vmatprep.subr.mxu0 0.0
        %841 = vmatpush1.msra.mxu0 0.0
        %842 = vmatprep.subr.mxu0 0.0
        %843 = vmatpush1.msra.mxu0 0.0
        %844 = vmatprep.subr.mxu0 0.0
        %845 = vmatpush1.msra.mxu0 0.0
        %846 = vmatprep.subr.mxu0 0.0
        %847 = vmatpush1.msra.mxu0 0.0
        %848 = vmatprep.subr.mxu0 0.0
        %849 = vmatpush1.msra.mxu0 0.0
        %850 = vmatprep.subr.mxu0 0.0
        %851 = vmatpush1.msra.mxu0 0.0
        %852 = vmatprep.subr.mxu0 0.0
        %853 = vmatpush1.msra.mxu0 0.0
        %854 = vmatprep.subr.mxu0 0.0
        %855 = vmatpush1.msra.mxu0 0.0
        %856 = vmatprep.subr.mxu0 0.0
        %857 = vmatpush1.msra.mxu0 0.0
        %858 = vmatprep.subr.mxu0 0.0
        %859 = vmatpush1.msra.mxu0 0.0
        %860 = vmatprep.subr.mxu0 0.0
        %861 = vmatpush1.msra.mxu0 0.0
        %862 = vmatprep.subr.mxu0 0.0
        %863 = vmatpush1.msra.mxu0 0.0
        %864 = vmatprep.subr.mxu0 0.0
        %865 = vmatpush1.msra.mxu0 0.0
        %866 = vmatprep.subr.mxu0 0.0
        %867 = vmatpush1.msra.mxu0 0.0
        %868 = vmatprep.subr.mxu0 0.0
        %869 = vmatpush1.msra.mxu0 0.0
        %870 = vmatprep.subr.mxu0 0.0
        %871 = vmatpush1.msra.mxu0 0.0
        %872 = vmatprep.subr.mxu0 0.0
        %873 = vmatpush1.msra.mxu0 0.0
        %874 = vmatprep.subr.mxu0 0.0
        %875 = vmatpush1.msra.mxu0 0.0
        %876 = vmatprep.subr.mxu0 0.0
        %877 = vmatpush1.msra.mxu0 0.0
        %878 = vmatprep.subr.mxu0 0.0
        %879 = vmatpush1.msra.mxu0 0.0
        %880 = vmatprep.subr.mxu0 0.0
        %881 = vmatpush1.msra.mxu0 0.0
        %882 = vmatprep.subr.mxu0 0.0
        %883 = vmatpush1.msra.mxu0 0.0
        %884 = vmatprep.subr.mxu0 0.0
        %885 = vmatpush1.msra.mxu0 0.0
        %886 = vmatprep.subr.mxu0 0.0
        %887 = vmatpush1.msra.mxu0 0.0
        %888 = vmatprep.subr.mxu0 0.0
        %889 = vmatpush1.msra.mxu0 0.0
        %890 = vmatprep.subr.mxu0 0.0
        %891 = vmatpush1.msra.mxu0 0.0
        %892 = vmatprep.mubr.f32.mxu0 0.0
        %v893 = vand.u32 %v608, 4294901760
        %v894 = vsub.f32 %v608, %v893
        %v895 = vand.u32 %v894, 4294901760
        %896 = vmatmul.mubr.f32.gmra.mrb[0].mxu0 %v895
        %v897 = vpop.f32.mrb[0].mxu0
        %v898 = vadd.f32 %v825, %v897
        %v899 = vpop.f32.mrb[0].mxu0
        %900 = vdwg.mxu0
        %901 = vmatprep.subr.mxu0 0.0
        %902 = vmatpush1.msra.mxu0 0.0
        %903 = vmatprep.subr.mxu0 0.0
        %904 = vmatpush1.msra.mxu0 0.0
        %905 = vmatprep.subr.mxu0 0.0
        %906 = vmatpush1.msra.mxu0 0.0
        %907 = vmatprep.subr.mxu0 0.0
        %908 = vmatpush1.msra.mxu0 0.0
        %909 = vmatprep.subr.mxu0 0.0
        %910 = vmatpush1.msra.mxu0 0.0
        %911 = vmatprep.subr.mxu0 0.0
        %912 = vmatpush1.msra.mxu0 0.0
        %913 = vmatprep.subr.mxu0 0.0
        %914 = vmatpush1.msra.mxu0 0.0
        %915 = vmatprep.subr.mxu0 0.0
        %916 = vmatpush1.msra.mxu0 0.0
        %917 = vmatprep.subr.mxu0 0.0
        %918 = vmatpush1.msra.mxu0 0.0
        %919 = vmatprep.subr.mxu0 0.0
        %920 = vmatpush1.msra.mxu0 0.0
        %921 = vmatprep.subr.mxu0 0.0
        %922 = vmatpush1.msra.mxu0 0.0
        %923 = vmatprep.subr.mxu0 0.0
        %924 = vmatpush1.msra.mxu0 0.0
        %925 = vmatprep.subr.mxu0 0.0
        %926 = vmatpush1.msra.mxu0 0.0
        %927 = vmatprep.subr.mxu0 0.0
        %928 = vmatpush1.msra.mxu0 0.0
        %929 = vmatprep.subr.mxu0 0.0
        %930 = vmatpush1.msra.mxu0 0.0
        %931 = vmatprep.subr.mxu0 0.0
        %932 = vmatpush1.msra.mxu0 0.0
        %933 = vmatprep.subr.mxu0 0.0
        %934 = vmatpush1.msra.mxu0 0.0
        %935 = vmatprep.subr.mxu0 0.0
        %936 = vmatpush1.msra.mxu0 0.0
        %937 = vmatprep.subr.mxu0 0.0
        %938 = vmatpush1.msra.mxu0 0.0
        %939 = vmatprep.subr.mxu0 0.0
        %940 = vmatpush1.msra.mxu0 0.0
        %941 = vmatprep.subr.mxu0 0.0
        %942 = vmatpush1.msra.mxu0 0.0
        %943 = vmatprep.subr.mxu0 0.0
        %944 = vmatpush1.msra.mxu0 0.0
        %945 = vmatprep.subr.mxu0 0.0
        %946 = vmatpush1.msra.mxu0 0.0
        %947 = vmatprep.subr.mxu0 0.0
        %948 = vmatpush1.msra.mxu0 0.0
        %949 = vmatprep.subr.mxu0 0.0
        %950 = vmatpush1.msra.mxu0 0.0
        %951 = vmatprep.subr.mxu0 0.0
        %952 = vmatpush1.msra.mxu0 0.0
        %953 = vmatprep.subr.mxu0 0.0
        %954 = vmatpush1.msra.mxu0 0.0
        %955 = vmatprep.subr.mxu0 0.0
        %956 = vmatpush1.msra.mxu0 0.0
        %957 = vmatprep.subr.mxu0 0.0
        %958 = vmatpush1.msra.mxu0 0.0
        %959 = vmatprep.subr.mxu0 0.0
        %960 = vmatpush1.msra.mxu0 0.0
        %961 = vmatprep.subr.mxu0 0.0
        %962 = vmatpush1.msra.mxu0 0.0
        %963 = vmatprep.subr.mxu0 0.0
        %964 = vmatpush1.msra.mxu0 0.0
        %965 = vmatprep.mubr.f32.mxu0 0.0
        %v966 = vand.u32 %v608, 4294901760
        %967 = vmatmul.mubr.f32.gmra.mrb[0].mxu0 %v966
        %v968 = vpop.f32.mrb[0].mxu0
        %v969 = vadd.f32 %v898, %v968
        %v970 = vpop.f32.mrb[0].mxu0
        %971 = vdwg.mxu0
        %972 = vmatprep.subr.mxu0 0.0
        %973 = vmatpush1.msra.mxu0 1.0
        %974 = vmatprep.subr.mxu0 0.0
        %975 = vmatpush1.msra.mxu0 1.0
        %976 = vmatprep.subr.mxu0 0.0
        %977 = vmatpush1.msra.mxu0 1.0
        %978 = vmatprep.subr.mxu0 0.0
        %979 = vmatpush1.msra.mxu0 1.0
        %980 = vmatprep.subr.mxu0 0.0
        %981 = vmatpush1.msra.mxu0 0.0
        %982 = vmatprep.subr.mxu0 0.0
        %983 = vmatpush1.msra.mxu0 0.0
        %984 = vmatprep.subr.mxu0 0.0
        %985 = vmatpush1.msra.mxu0 0.0
        %986 = vmatprep.subr.mxu0 0.0
        %987 = vmatpush1.msra.mxu0 0.0
        %988 = vmatprep.subr.mxu0 0.0
        %989 = vmatpush1.msra.mxu0 0.0
        %990 = vmatprep.subr.mxu0 0.0
        %991 = vmatpush1.msra.mxu0 0.0
        %992 = vmatprep.subr.mxu0 0.0
        %993 = vmatpush1.msra.mxu0 0.0
        %994 = vmatprep.subr.mxu0 0.0
        %995 = vmatpush1.msra.mxu0 0.0
        %996 = vmatprep.subr.mxu0 0.0
        %997 = vmatpush1.msra.mxu0 0.0
        %998 = vmatprep.subr.mxu0 0.0
        %999 = vmatpush1.msra.mxu0 0.0
        %1000 = vmatprep.subr.mxu0 0.0
        %1001 = vmatpush1.msra.mxu0 0.0
        %1002 = vmatprep.subr.mxu0 0.0
        %1003 = vmatpush1.msra.mxu0 0.0
        %1004 = vmatprep.subr.mxu0 0.0
        %1005 = vmatpush1.msra.mxu0 0.0
        %1006 = vmatprep.subr.mxu0 0.0
        %1007 = vmatpush1.msra.mxu0 0.0
        %1008 = vmatprep.subr.mxu0 0.0
        %1009 = vmatpush1.msra.mxu0 0.0
        %1010 = vmatprep.subr.mxu0 0.0
        %1011 = vmatpush1.msra.mxu0 0.0
        %1012 = vmatprep.subr.mxu0 0.0
        %1013 = vmatpush1.msra.mxu0 0.0
        %1014 = vmatprep.subr.mxu0 0.0
        %1015 = vmatpush1.msra.mxu0 0.0
        %1016 = vmatprep.subr.mxu0 0.0
        %1017 = vmatpush1.msra.mxu0 0.0
        %1018 = vmatprep.subr.mxu0 0.0
        %1019 = vmatpush1.msra.mxu0 0.0
        %1020 = vmatprep.subr.mxu0 0.0
        %1021 = vmatpush1.msra.mxu0 0.0
        %1022 = vmatprep.subr.mxu0 0.0
        %1023 = vmatpush1.msra.mxu0 0.0
        %1024 = vmatprep.subr.mxu0 0.0
        %1025 = vmatpush1.msra.mxu0 0.0
        %1026 = vmatprep.subr.mxu0 0.0
        %1027 = vmatpush1.msra.mxu0 0.0
        %1028 = vmatprep.subr.mxu0 0.0
        %1029 = vmatpush1.msra.mxu0 0.0
        %1030 = vmatprep.subr.mxu0 0.0
        %1031 = vmatpush1.msra.mxu0 0.0
        %1032 = vmatprep.subr.mxu0 0.0
        %1033 = vmatpush1.msra.mxu0 0.0
        %1034 = vmatprep.subr.mxu0 0.0
        %1035 = vmatpush1.msra.mxu0 0.0
        %1036 = vmatprep.mubr.f32.mxu0 0.0
        %v1037 = vand.u32 %v608, 4294901760
        %1038 = vmatmul.mubr.f32.gmra.mrb[0].mxu0 %v1037
        %v1039 = vpop.f32.mrb[0].mxu0
        %v1040 = vadd.f32 %v969, %v1039
        %v1041 = vpop.f32.mrb[0].mxu0
        %1042 = vdwg.mxu0
        %v1044 = vsel %vm170, %v169, 0
        %1046 = vmatprep.subr.mxu0 0.0
        %1047 = vmatpush1.msra.mxu0 1.0
        %1048 = vmatprep.subr.mxu0 0.0
        %1049 = vmatpush1.msra.mxu0 1.0
        %1050 = vmatprep.subr.mxu0 0.0
        %1051 = vmatpush1.msra.mxu0 1.0
        %1052 = vmatprep.subr.mxu0 0.0
        %1053 = vmatpush1.msra.mxu0 1.0
        %1054 = vmatprep.subr.mxu0 0.0
        %1055 = vmatpush1.msra.mxu0 0.0
        %1056 = vmatprep.subr.mxu0 0.0
        %1057 = vmatpush1.msra.mxu0 0.0
        %1058 = vmatprep.subr.mxu0 0.0
        %1059 = vmatpush1.msra.mxu0 0.0
        %1060 = vmatprep.subr.mxu0 0.0
        %1061 = vmatpush1.msra.mxu0 0.0
        %1062 = vmatprep.subr.mxu0 0.0
        %1063 = vmatpush1.msra.mxu0 0.0
        %1064 = vmatprep.subr.mxu0 0.0
        %1065 = vmatpush1.msra.mxu0 0.0
        %1066 = vmatprep.subr.mxu0 0.0
        %1067 = vmatpush1.msra.mxu0 0.0
        %1068 = vmatprep.subr.mxu0 0.0
        %1069 = vmatpush1.msra.mxu0 0.0
        %1070 = vmatprep.subr.mxu0 0.0
        %1071 = vmatpush1.msra.mxu0 0.0
        %1072 = vmatprep.subr.mxu0 0.0
        %1073 = vmatpush1.msra.mxu0 0.0
        %1074 = vmatprep.subr.mxu0 0.0
        %1075 = vmatpush1.msra.mxu0 0.0
        %1076 = vmatprep.subr.mxu0 0.0
        %1077 = vmatpush1.msra.mxu0 0.0
        %1078 = vmatprep.subr.mxu0 0.0
        %1079 = vmatpush1.msra.mxu0 0.0
        %1080 = vmatprep.subr.mxu0 0.0
        %1081 = vmatpush1.msra.mxu0 0.0
        %1082 = vmatprep.subr.mxu0 0.0
        %1083 = vmatpush1.msra.mxu0 0.0
        %1084 = vmatprep.subr.mxu0 0.0
        %1085 = vmatpush1.msra.mxu0 0.0
        %1086 = vmatprep.subr.mxu0 0.0
        %1087 = vmatpush1.msra.mxu0 0.0
        %1088 = vmatprep.subr.mxu0 0.0
        %1089 = vmatpush1.msra.mxu0 0.0
        %1090 = vmatprep.subr.mxu0 0.0
        %1091 = vmatpush1.msra.mxu0 0.0
        %1092 = vmatprep.subr.mxu0 0.0
        %1093 = vmatpush1.msra.mxu0 0.0
        %1094 = vmatprep.subr.mxu0 0.0
        %1095 = vmatpush1.msra.mxu0 0.0
        %1096 = vmatprep.subr.mxu0 0.0
        %1097 = vmatpush1.msra.mxu0 0.0
        %1098 = vmatprep.subr.mxu0 0.0
        %1099 = vmatpush1.msra.mxu0 0.0
        %1100 = vmatprep.subr.mxu0 0.0
        %1101 = vmatpush1.msra.mxu0 0.0
        %1102 = vmatprep.subr.mxu0 0.0
        %1103 = vmatpush1.msra.mxu0 0.0
        %1104 = vmatprep.subr.mxu0 0.0
        %1105 = vmatpush1.msra.mxu0 0.0
        %1106 = vmatprep.subr.mxu0 0.0
        %1107 = vmatpush1.msra.mxu0 0.0
        %1108 = vmatprep.subr.mxu0 0.0
        %1109 = vmatpush1.msra.mxu0 0.0
        %1110 = vmatprep.mubr.f32.mxu0 0.0
        %v1111 = vand.u32 %v1044, 4294901760
        %v1112 = vsub.f32 %v1044, %v1111
        %v1113 = vand.u32 %v1112, 4294901760
        %v1114 = vsub.f32 %v1112, %v1113
        %v1115 = vand.u32 %v1114, 4294901760
        %1116 = vmatmul.mubr.f32.gmra.mrb[0].mxu0 %v1115
        %v1117 = vpop.f32.mrb[0].mxu0
        %v1118 = vadd.f32 0.0, %v1117
        %v1119 = vpop.f32.mrb[0].mxu0
        %1120 = vdwg.mxu0
        %1121 = vmatprep.subr.mxu0 0.0
        %1122 = vmatpush1.msra.mxu0 0.0
        %1123 = vmatprep.subr.mxu0 0.0
        %1124 = vmatpush1.msra.mxu0 0.0
        %1125 = vmatprep.subr.mxu0 0.0
        %1126 = vmatpush1.msra.mxu0 0.0
        %1127 = vmatprep.subr.mxu0 0.0
        %1128 = vmatpush1.msra.mxu0 0.0
        %1129 = vmatprep.subr.mxu0 0.0
        %1130 = vmatpush1.msra.mxu0 0.0
        %1131 = vmatprep.subr.mxu0 0.0
        %1132 = vmatpush1.msra.mxu0 0.0
        %1133 = vmatprep.subr.mxu0 0.0
        %1134 = vmatpush1.msra.mxu0 0.0
        %1135 = vmatprep.subr.mxu0 0.0
        %1136 = vmatpush1.msra.mxu0 0.0
        %1137 = vmatprep.subr.mxu0 0.0
        %1138 = vmatpush1.msra.mxu0 0.0
        %1139 = vmatprep.subr.mxu0 0.0
        %1140 = vmatpush1.msra.mxu0 0.0
        %1141 = vmatprep.subr.mxu0 0.0
        %1142 = vmatpush1.msra.mxu0 0.0
        %1143 = vmatprep.subr.mxu0 0.0
        %1144 = vmatpush1.msra.mxu0 0.0
        %1145 = vmatprep.subr.mxu0 0.0
        %1146 = vmatpush1.msra.mxu0 0.0
        %1147 = vmatprep.subr.mxu0 0.0
        %1148 = vmatpush1.msra.mxu0 0.0
        %1149 = vmatprep.subr.mxu0 0.0
        %1150 = vmatpush1.msra.mxu0 0.0
        %1151 = vmatprep.subr.mxu0 0.0
        %1152 = vmatpush1.msra.mxu0 0.0
        %1153 = vmatprep.subr.mxu0 0.0
        %1154 = vmatpush1.msra.mxu0 0.0
        %1155 = vmatprep.subr.mxu0 0.0
        %1156 = vmatpush1.msra.mxu0 0.0
        %1157 = vmatprep.subr.mxu0 0.0
        %1158 = vmatpush1.msra.mxu0 0.0
        %1159 = vmatprep.subr.mxu0 0.0
        %1160 = vmatpush1.msra.mxu0 0.0
        %1161 = vmatprep.subr.mxu0 0.0
        %1162 = vmatpush1.msra.mxu0 0.0
        %1163 = vmatprep.subr.mxu0 0.0
        %1164 = vmatpush1.msra.mxu0 0.0
        %1165 = vmatprep.subr.mxu0 0.0
        %1166 = vmatpush1.msra.mxu0 0.0
        %1167 = vmatprep.subr.mxu0 0.0
        %1168 = vmatpush1.msra.mxu0 0.0
        %1169 = vmatprep.subr.mxu0 0.0
        %1170 = vmatpush1.msra.mxu0 0.0
        %1171 = vmatprep.subr.mxu0 0.0
        %1172 = vmatpush1.msra.mxu0 0.0
        %1173 = vmatprep.subr.mxu0 0.0
        %1174 = vmatpush1.msra.mxu0 0.0
        %1175 = vmatprep.subr.mxu0 0.0
        %1176 = vmatpush1.msra.mxu0 0.0
        %1177 = vmatprep.subr.mxu0 0.0
        %1178 = vmatpush1.msra.mxu0 0.0
        %1179 = vmatprep.subr.mxu0 0.0
        %1180 = vmatpush1.msra.mxu0 0.0
        %1181 = vmatprep.subr.mxu0 0.0
        %1182 = vmatpush1.msra.mxu0 0.0
        %1183 = vmatprep.subr.mxu0 0.0
        %1184 = vmatpush1.msra.mxu0 0.0
        %1185 = vmatprep.mubr.f32.mxu0 0.0
        %v1186 = vand.u32 %v1044, 4294901760
        %1187 = vmatmul.mubr.f32.gmra.mrb[0].mxu0 %v1186
        %v1188 = vpop.f32.mrb[0].mxu0
        %v1189 = vadd.f32 %v1118, %v1188
        %v1190 = vpop.f32.mrb[0].mxu0
        %1191 = vdwg.mxu0
        %1192 = vmatprep.subr.mxu0 0.0
        %1193 = vmatpush1.msra.mxu0 0.0
        %1194 = vmatprep.subr.mxu0 0.0
        %1195 = vmatpush1.msra.mxu0 0.0
        %1196 = vmatprep.subr.mxu0 0.0
        %1197 = vmatpush1.msra.mxu0 0.0
        %1198 = vmatprep.subr.mxu0 0.0
        %1199 = vmatpush1.msra.mxu0 0.0
        %1200 = vmatprep.subr.mxu0 0.0
        %1201 = vmatpush1.msra.mxu0 0.0
        %1202 = vmatprep.subr.mxu0 0.0
        %1203 = vmatpush1.msra.mxu0 0.0
        %1204 = vmatprep.subr.mxu0 0.0
        %1205 = vmatpush1.msra.mxu0 0.0
        %1206 = vmatprep.subr.mxu0 0.0
        %1207 = vmatpush1.msra.mxu0 0.0
        %1208 = vmatprep.subr.mxu0 0.0
        %1209 = vmatpush1.msra.mxu0 0.0
        %1210 = vmatprep.subr.mxu0 0.0
        %1211 = vmatpush1.msra.mxu0 0.0
        %1212 = vmatprep.subr.mxu0 0.0
        %1213 = vmatpush1.msra.mxu0 0.0
        %1214 = vmatprep.subr.mxu0 0.0
        %1215 = vmatpush1.msra.mxu0 0.0
        %1216 = vmatprep.subr.mxu0 0.0
        %1217 = vmatpush1.msra.mxu0 0.0
        %1218 = vmatprep.subr.mxu0 0.0
        %1219 = vmatpush1.msra.mxu0 0.0
        %1220 = vmatprep.subr.mxu0 0.0
        %1221 = vmatpush1.msra.mxu0 0.0
        %1222 = vmatprep.subr.mxu0 0.0
        %1223 = vmatpush1.msra.mxu0 0.0
        %1224 = vmatprep.subr.mxu0 0.0
        %1225 = vmatpush1.msra.mxu0 0.0
        %1226 = vmatprep.subr.mxu0 0.0
        %1227 = vmatpush1.msra.mxu0 0.0
        %1228 = vmatprep.subr.mxu0 0.0
        %1229 = vmatpush1.msra.mxu0 0.0
        %1230 = vmatprep.subr.mxu0 0.0
        %1231 = vmatpush1.msra.mxu0 0.0
        %1232 = vmatprep.subr.mxu0 0.0
        %1233 = vmatpush1.msra.mxu0 0.0
        %1234 = vmatprep.subr.mxu0 0.0
        %1235 = vmatpush1.msra.mxu0 0.0
        %1236 = vmatprep.subr.mxu0 0.0
        %1237 = vmatpush1.msra.mxu0 0.0
        %1238 = vmatprep.subr.mxu0 0.0
        %1239 = vmatpush1.msra.mxu0 0.0
        %1240 = vmatprep.subr.mxu0 0.0
        %1241 = vmatpush1.msra.mxu0 0.0
        %1242 = vmatprep.subr.mxu0 0.0
        %1243 = vmatpush1.msra.mxu0 0.0
        %1244 = vmatprep.subr.mxu0 0.0
        %1245 = vmatpush1.msra.mxu0 0.0
        %1246 = vmatprep.subr.mxu0 0.0
        %1247 = vmatpush1.msra.mxu0 0.0
        %1248 = vmatprep.subr.mxu0 0.0
        %1249 = vmatpush1.msra.mxu0 0.0
        %1250 = vmatprep.subr.mxu0 0.0
        %1251 = vmatpush1.msra.mxu0 0.0
        %1252 = vmatprep.subr.mxu0 0.0
        %1253 = vmatpush1.msra.mxu0 0.0
        %1254 = vmatprep.subr.mxu0 0.0
        %1255 = vmatpush1.msra.mxu0 0.0
        %1256 = vmatprep.mubr.f32.mxu0 0.0
        %v1257 = vand.u32 %v1044, 4294901760
        %v1258 = vsub.f32 %v1044, %v1257
        %1259 = vmatmul.mubr.f32.gmra.mrb[0].mxu0 %v1258
        %v1260 = vpop.f32.mrb[0].mxu0
        %v1261 = vadd.f32 %v1189, %v1260
        %v1262 = vpop.f32.mrb[0].mxu0
        %1263 = vdwg.mxu0
        %1264 = vmatprep.subr.mxu0 0.0
        %1265 = vmatpush1.msra.mxu0 1.0
        %1266 = vmatprep.subr.mxu0 0.0
        %1267 = vmatpush1.msra.mxu0 1.0
        %1268 = vmatprep.subr.mxu0 0.0
        %1269 = vmatpush1.msra.mxu0 1.0
        %1270 = vmatprep.subr.mxu0 0.0
        %1271 = vmatpush1.msra.mxu0 1.0
        %1272 = vmatprep.subr.mxu0 0.0
        %1273 = vmatpush1.msra.mxu0 0.0
        %1274 = vmatprep.subr.mxu0 0.0
        %1275 = vmatpush1.msra.mxu0 0.0
        %1276 = vmatprep.subr.mxu0 0.0
        %1277 = vmatpush1.msra.mxu0 0.0
        %1278 = vmatprep.subr.mxu0 0.0
        %1279 = vmatpush1.msra.mxu0 0.0
        %1280 = vmatprep.subr.mxu0 0.0
        %1281 = vmatpush1.msra.mxu0 0.0
        %1282 = vmatprep.subr.mxu0 0.0
        %1283 = vmatpush1.msra.mxu0 0.0
        %1284 = vmatprep.subr.mxu0 0.0
        %1285 = vmatpush1.msra.mxu0 0.0
        %1286 = vmatprep.subr.mxu0 0.0
        %1287 = vmatpush1.msra.mxu0 0.0
        %1288 = vmatprep.subr.mxu0 0.0
        %1289 = vmatpush1.msra.mxu0 0.0
        %1290 = vmatprep.subr.mxu0 0.0
        %1291 = vmatpush1.msra.mxu0 0.0
        %1292 = vmatprep.subr.mxu0 0.0
        %1293 = vmatpush1.msra.mxu0 0.0
        %1294 = vmatprep.subr.mxu0 0.0
        %1295 = vmatpush1.msra.mxu0 0.0
        %1296 = vmatprep.subr.mxu0 0.0
        %1297 = vmatpush1.msra.mxu0 0.0
        %1298 = vmatprep.subr.mxu0 0.0
        %1299 = vmatpush1.msra.mxu0 0.0
        %1300 = vmatprep.subr.mxu0 0.0
        %1301 = vmatpush1.msra.mxu0 0.0
        %1302 = vmatprep.subr.mxu0 0.0
        %1303 = vmatpush1.msra.mxu0 0.0
        %1304 = vmatprep.subr.mxu0 0.0
        %1305 = vmatpush1.msra.mxu0 0.0
        %1306 = vmatprep.subr.mxu0 0.0
        %1307 = vmatpush1.msra.mxu0 0.0
        %1308 = vmatprep.subr.mxu0 0.0
        %1309 = vmatpush1.msra.mxu0 0.0
        %1310 = vmatprep.subr.mxu0 0.0
        %1311 = vmatpush1.msra.mxu0 0.0
        %1312 = vmatprep.subr.mxu0 0.0
        %1313 = vmatpush1.msra.mxu0 0.0
        %1314 = vmatprep.subr.mxu0 0.0
        %1315 = vmatpush1.msra.mxu0 0.0
        %1316 = vmatprep.subr.mxu0 0.0
        %1317 = vmatpush1.msra.mxu0 0.0
        %1318 = vmatprep.subr.mxu0 0.0
        %1319 = vmatpush1.msra.mxu0 0.0
        %1320 = vmatprep.subr.mxu0 0.0
        %1321 = vmatpush1.msra.mxu0 0.0
        %1322 = vmatprep.subr.mxu0 0.0
        %1323 = vmatpush1.msra.mxu0 0.0
        %1324 = vmatprep.subr.mxu0 0.0
        %1325 = vmatpush1.msra.mxu0 0.0
        %1326 = vmatprep.subr.mxu0 0.0
        %1327 = vmatpush1.msra.mxu0 0.0
        %1328 = vmatprep.mubr.f32.mxu0 0.0
        %v1329 = vand.u32 %v1044, 4294901760
        %v1330 = vsub.f32 %v1044, %v1329
        %v1331 = vand.u32 %v1330, 4294901760
        %1332 = vmatmul.mubr.f32.gmra.mrb[0].mxu0 %v1331
        %v1333 = vpop.f32.mrb[0].mxu0
        %v1334 = vadd.f32 %v1261, %v1333
        %v1335 = vpop.f32.mrb[0].mxu0
        %1336 = vdwg.mxu0
        %1337 = vmatprep.subr.mxu0 0.0
        %1338 = vmatpush1.msra.mxu0 0.0
        %1339 = vmatprep.subr.mxu0 0.0
        %1340 = vmatpush1.msra.mxu0 0.0
        %1341 = vmatprep.subr.mxu0 0.0
        %1342 = vmatpush1.msra.mxu0 0.0
        %1343 = vmatprep.subr.mxu0 0.0
        %1344 = vmatpush1.msra.mxu0 0.0
        %1345 = vmatprep.subr.mxu0 0.0
        %1346 = vmatpush1.msra.mxu0 0.0
        %1347 = vmatprep.subr.mxu0 0.0
        %1348 = vmatpush1.msra.mxu0 0.0
        %1349 = vmatprep.subr.mxu0 0.0
        %1350 = vmatpush1.msra.mxu0 0.0
        %1351 = vmatprep.subr.mxu0 0.0
        %1352 = vmatpush1.msra.mxu0 0.0
        %1353 = vmatprep.subr.mxu0 0.0
        %1354 = vmatpush1.msra.mxu0 0.0
        %1355 = vmatprep.subr.mxu0 0.0
        %1356 = vmatpush1.msra.mxu0 0.0
        %1357 = vmatprep.subr.mxu0 0.0
        %1358 = vmatpush1.msra.mxu0 0.0
        %1359 = vmatprep.subr.mxu0 0.0
        %1360 = vmatpush1.msra.mxu0 0.0
        %1361 = vmatprep.subr.mxu0 0.0
        %1362 = vmatpush1.msra.mxu0 0.0
        %1363 = vmatprep.subr.mxu0 0.0
        %1364 = vmatpush1.msra.mxu0 0.0
        %1365 = vmatprep.subr.mxu0 0.0
        %1366 = vmatpush1.msra.mxu0 0.0
        %1367 = vmatprep.subr.mxu0 0.0
        %1368 = vmatpush1.msra.mxu0 0.0
        %1369 = vmatprep.subr.mxu0 0.0
        %1370 = vmatpush1.msra.mxu0 0.0
        %1371 = vmatprep.subr.mxu0 0.0
        %1372 = vmatpush1.msra.mxu0 0.0
        %1373 = vmatprep.subr.mxu0 0.0
        %1374 = vmatpush1.msra.mxu0 0.0
        %1375 = vmatprep.subr.mxu0 0.0
        %1376 = vmatpush1.msra.mxu0 0.0
        %1377 = vmatprep.subr.mxu0 0.0
        %1378 = vmatpush1.msra.mxu0 0.0
        %1379 = vmatprep.subr.mxu0 0.0
        %1380 = vmatpush1.msra.mxu0 0.0
        %1381 = vmatprep.subr.mxu0 0.0
        %1382 = vmatpush1.msra.mxu0 0.0
        %1383 = vmatprep.subr.mxu0 0.0
        %1384 = vmatpush1.msra.mxu0 0.0
        %1385 = vmatprep.subr.mxu0 0.0
        %1386 = vmatpush1.msra.mxu0 0.0
        %1387 = vmatprep.subr.mxu0 0.0
        %1388 = vmatpush1.msra.mxu0 0.0
        %1389 = vmatprep.subr.mxu0 0.0
        %1390 = vmatpush1.msra.mxu0 0.0
        %1391 = vmatprep.subr.mxu0 0.0
        %1392 = vmatpush1.msra.mxu0 0.0
        %1393 = vmatprep.subr.mxu0 0.0
        %1394 = vmatpush1.msra.mxu0 0.0
        %1395 = vmatprep.subr.mxu0 0.0
        %1396 = vmatpush1.msra.mxu0 0.0
        %1397 = vmatprep.subr.mxu0 0.0
        %1398 = vmatpush1.msra.mxu0 0.0
        %1399 = vmatprep.subr.mxu0 0.0
        %1400 = vmatpush1.msra.mxu0 0.0
        %1401 = vmatprep.mubr.f32.mxu0 0.0
        %v1402 = vand.u32 %v1044, 4294901760
        %1403 = vmatmul.mubr.f32.gmra.mrb[0].mxu0 %v1402
        %v1404 = vpop.f32.mrb[0].mxu0
        %v1405 = vadd.f32 %v1334, %v1404
        %v1406 = vpop.f32.mrb[0].mxu0
        %1407 = vdwg.mxu0
        %1408 = vmatprep.subr.mxu0 0.0
        %1409 = vmatpush1.msra.mxu0 1.0
        %1410 = vmatprep.subr.mxu0 0.0
        %1411 = vmatpush1.msra.mxu0 1.0
        %1412 = vmatprep.subr.mxu0 0.0
        %1413 = vmatpush1.msra.mxu0 1.0
        %1414 = vmatprep.subr.mxu0 0.0
        %1415 = vmatpush1.msra.mxu0 1.0
        %1416 = vmatprep.subr.mxu0 0.0
        %1417 = vmatpush1.msra.mxu0 0.0
        %1418 = vmatprep.subr.mxu0 0.0
        %1419 = vmatpush1.msra.mxu0 0.0
        %1420 = vmatprep.subr.mxu0 0.0
        %1421 = vmatpush1.msra.mxu0 0.0
        %1422 = vmatprep.subr.mxu0 0.0
        %1423 = vmatpush1.msra.mxu0 0.0
        %1424 = vmatprep.subr.mxu0 0.0
        %1425 = vmatpush1.msra.mxu0 0.0
        %1426 = vmatprep.subr.mxu0 0.0
        %1427 = vmatpush1.msra.mxu0 0.0
        %1428 = vmatprep.subr.mxu0 0.0
        %1429 = vmatpush1.msra.mxu0 0.0
        %1430 = vmatprep.subr.mxu0 0.0
        %1431 = vmatpush1.msra.mxu0 0.0
        %1432 = vmatprep.subr.mxu0 0.0
        %1433 = vmatpush1.msra.mxu0 0.0
        %1434 = vmatprep.subr.mxu0 0.0
        %1435 = vmatpush1.msra.mxu0 0.0
        %1436 = vmatprep.subr.mxu0 0.0
        %1437 = vmatpush1.msra.mxu0 0.0
        %1438 = vmatprep.subr.mxu0 0.0
        %1439 = vmatpush1.msra.mxu0 0.0
        %1440 = vmatprep.subr.mxu0 0.0
        %1441 = vmatpush1.msra.mxu0 0.0
        %1442 = vmatprep.subr.mxu0 0.0
        %1443 = vmatpush1.msra.mxu0 0.0
        %1444 = vmatprep.subr.mxu0 0.0
        %1445 = vmatpush1.msra.mxu0 0.0
        %1446 = vmatprep.subr.mxu0 0.0
        %1447 = vmatpush1.msra.mxu0 0.0
        %1448 = vmatprep.subr.mxu0 0.0
        %1449 = vmatpush1.msra.mxu0 0.0
        %1450 = vmatprep.subr.mxu0 0.0
        %1451 = vmatpush1.msra.mxu0 0.0
        %1452 = vmatprep.subr.mxu0 0.0
        %1453 = vmatpush1.msra.mxu0 0.0
        %1454 = vmatprep.subr.mxu0 0.0
        %1455 = vmatpush1.msra.mxu0 0.0
        %1456 = vmatprep.subr.mxu0 0.0
        %1457 = vmatpush1.msra.mxu0 0.0
        %1458 = vmatprep.subr.mxu0 0.0
        %1459 = vmatpush1.msra.mxu0 0.0
        %1460 = vmatprep.subr.mxu0 0.0
        %1461 = vmatpush1.msra.mxu0 0.0
        %1462 = vmatprep.subr.mxu0 0.0
        %1463 = vmatpush1.msra.mxu0 0.0
        %1464 = vmatprep.subr.mxu0 0.0
        %1465 = vmatpush1.msra.mxu0 0.0
        %1466 = vmatprep.subr.mxu0 0.0
        %1467 = vmatpush1.msra.mxu0 0.0
        %1468 = vmatprep.subr.mxu0 0.0
        %1469 = vmatpush1.msra.mxu0 0.0
        %1470 = vmatprep.subr.mxu0 0.0
        %1471 = vmatpush1.msra.mxu0 0.0
        %1472 = vmatprep.mubr.f32.mxu0 0.0
        %v1473 = vand.u32 %v1044, 4294901760
        %1474 = vmatmul.mubr.f32.gmra.mrb[0].mxu0 %v1473
        %v1475 = vpop.f32.mrb[0].mxu0
        %v1476 = vadd.f32 %v1405, %v1475
        %v1477 = vpop.f32.mrb[0].mxu0
        %1478 = vdwg.mxu0
        %v1479 = vmax.f32 %v604, 1.0
        %v1480 = vrcp.pop %v1479
        %v1481 = vmul.f32 0.1, %v1480
        %v1482 = vmul.f32 %v1476, 0.9
        %v1483 = vsub.f32 %v1040, %v1476
        %v1484 = vmul.f32 %v1481, %v1483
        %v1485 = vadd.f32 %v1482, %v1484
        %v1486 = vlaneseq
        %v1487 = vshrl.u32 %v1486, 7
        %s1488 = smul.u32 %s16, 8
        %v1489 = vstv %s1488
        %v1490 = vadd.s32 %v1489, %v1487
        %vm1491 = vcmp.lt.s32.totalorder %v1490, 16
        %vm1492 = vcmp.ne.s32.totalorder %v157, 0
        %vm1493 = vmand %vm1491, %vm1492
        %v1494 = vsel %vm1493, %v1485, 0.0
        %vm1495 = vcmask 7168
        %v1496 = vsel %vm1495, %v1494, 0.0
        %1497 = vadd.xlane.f32.xlu0 %v1496
        %v1498 = vpop.xlane.xlu0 %1497
        %v1499 = vrot.slane %v1498, 4
        %v1500 = vadd.f32 %v1498, %v1499
        %v1501 = vrot.slane %v1500, 2
        %v1502 = vadd.f32 %v1500, %v1501
        %v1503 = vrot.slane %v1502, 1
        %v1504 = vadd.f32 %v1502, %v1503
        %s1505 = vtos %v1504
        %s1506 = ssub.f32 0.0, %s1505
        %v1507 = vsel %vm1493, 1, 0
        %v1508 = vcvt.s32.f32 %v1507
        %v1509 = vsel %vm1495, %v1508, 0.0
        %1510 = vadd.xlane.f32.xlu0 %v1509
        %v1511 = vpop.xlane.xlu0 %1510
        %v1512 = vrot.slane %v1511, 4
        %v1513 = vadd.f32 %v1511, %v1512
        %v1514 = vrot.slane %v1513, 2
        %v1515 = vadd.f32 %v1513, %v1514
        %v1516 = vrot.slane %v1515, 1
        %v1517 = vadd.f32 %v1515, %v1516
        %s1518 = vtos %v1517
        %vm1519 = vcmp.eq.s32.totalorder %v1487, 0
        %vm1520 = vcmp.eq.s32.totalorder %v164, 0
        %vm1521 = vmand %vm1519, %vm1520
        %vm1522 = vcmp.eq.s32.totalorder %v164, 1
        %vm1523 = vmand %vm1519, %vm1522
        %v1524 = vstv %s1518
        %v1525 = vsel %vm1523, %v1524, 0.0
        %v1526 = vstv %s1506
        %v1527 = vsel %vm1521, %v1526, %v1525
        %1528 = vst [vmem:[%s147] sm:$0xff] %v1527
        %s1529 = sand.u32 %s76, 1
        %s1530 = scalar_lea.sflag [#allocation3], %s1529
        %s1531 = sand.u32 %s76, 1
        %s1532 = smul.addr %s1531, 8
        %s1533 = scalar_lea.vmem [#allocation2], %s1532
        // Predicated region
        $region29: #{tpu_custom_call.1} parent=27 // pred_check
          %p1534 = pneg %p86
        $region30: #{tpu_custom_call.1} parent=27 // pred_check_branch
          %1536 = sbr.rel (%p1534) target = $region32
        $region31: #{tpu_custom_call.1} parent=27 // pred_region
          %s1538 = ssub.s32 128, 128
          %1539 = vsyncadd %s1530, %s1538
          %s1540 = smul.addr %s16, 128
          %s1541 = scalar_lea.hbm %s2, %s1540
          %s1543 = sshll.u32 %s1533, 4
          %s1544 = int_to_ptr.vmem [resolvable:$true] %s1543
          %1546 = dma.vmem_to_hbm [thread:$0]  %s1544, 128, %s1541, %s1530
        $region32: #{tpu_custom_call.1} parent=27 // pred_fallthru
          _
      $region28: #{tpu_custom_call.1} parent=5 // pred_fallthru
        _
      %p1547 = scmp.le.s32.totalorder 2, %s11
      // Predicated region
      $region33: #{tpu_custom_call.1} parent=5 // pred_check
        %p1548 = pneg %p1547
      $region34: #{tpu_custom_call.1} parent=5 // pred_check_branch
        %1550 = sbr.rel (%p1548) target = $region36
      $region35: #{tpu_custom_call.1} parent=5 // pred_region
        %s1551 = ssub.s32 %s11, 2
        // Predicated region
        $region37: #{tpu_custom_call.1} parent=35 // pred_check
          %p1552 = pneg %p92
        $region38: #{tpu_custom_call.1} parent=35 // pred_check_branch
          %1554 = sbr.rel (%p1552) target = $region40
        $region39: #{tpu_custom_call.1} parent=35 // pred_region
          %s1555 = sand.u32 %s77, 1
          %s1556 = scalar_lea.sflag [#allocation3], %s1555
          %s1557 = sand.u32 %s77, 1
          %s1558 = smul.addr %s1557, 8
          %s1559 = scalar_lea.vmem [#allocation2], %s1558
          %1560 = dma.done %s1556, 128
        $region40: #{tpu_custom_call.1} parent=35 // pred_fallthru
          _
      $region36: #{tpu_custom_call.1} parent=5 // pred_fallthru
        _
    $region6: #{tpu_custom_call.1} parent=1 // loop_footer
      %s15 = sadd.s32 1, %s11
    $region7: #{tpu_custom_call.1} parent=1 // loop_footer_branch
      %10 = sbr.rel target = $region3
    $region8: #{tpu_custom_call.1} parent=1 // loop_exit
      _
    %1561 = vsyncpa [#allocation3], 1
    %s1562 = scalar_lea.sflag [#allocation3], 1
    %1563 = vsyncpa %s1562, 1

</llo_original>
